<compile_context>
chip_gen: v5e
topology: v5e:2x2
jax: 0.10.0
libtpu: 0.0.40
codegen_flags: <defaults>
</compile_context>

<pallas_src>
import functools

import jax
import jax.numpy as jnp
import numpy as np
from jax.experimental import pallas as pl
from jax.experimental.pallas import tpu as pltpu


# ------------------------------ fused kernel ------------------------------- #
def conv_bn_relu_kernel(x_ref, w_ref, g_ref, b_ref, o_ref,
                        y_all, stat, ss, *,
                        ksize, pad, width, hw, cout, n_imgs, eps):
    """Phase 0: 'same' KxK conv (K*K shifted matmuls) + per-channel partial
    sums.  Phase 1: fold BN into scale/shift (once) and apply BN + ReLU.

    x_ref:  (1, Cin, (H+2p)*W + 2p)  H-padded, flattened, flat-padded image
    w_ref:  (K*K, Cout, Cin)         per-tap weight matrices
    g_ref:  (Cout, 1)  gamma         b_ref: (Cout, 1)  beta
    o_ref:  (1, Cout, H*W)           output, channel-major (lane-dense)
    y_all:  VMEM (N, Cout, H*W)      conv intermediate, kept on-chip
    stat:   VMEM (2, Cout, 1)        [sum, sum-of-squares] accumulators
    ss:     VMEM (2, Cout, 1)        folded [scale, shift]
    """
    ph = pl.program_id(0)            # 0 = conv + stats, 1 = BN + ReLU
    i = pl.program_id(1)             # image index

    @pl.when(ph == 0)
    def _conv_and_stats():
        @pl.when(i == 0)
        def _init():
            stat[...] = jnp.zeros_like(stat)

        # Output column index; used to zero contributions that wrapped across
        # the (unpadded) W boundary when the spatial shift was flattened.
        col = jax.lax.broadcasted_iota(jnp.int32, (1, hw), 1) % width

        # Hoist the per-kw lane masks out of the tap loop (reused across kh).
        masks = {}
        for kw in range(ksize):
            lo = max(pad - kw, 0)
            hi = min(width + pad - kw, width)
            if lo > 0 or hi < width:                     # only edge taps
                masks[kw] = ((col >= lo) & (col < hi)).astype(jnp.float32)

        acc = jnp.zeros((cout, hw), jnp.float32)
        for kh in range(ksize):
            for kw in range(ksize):
                off = kh * width + kw                    # static lane offset
                xs = x_ref[0, :, off:off + hw]           # (Cin, H*W)
                if kw in masks:
                    xs = xs * masks[kw]
                acc = acc + jnp.dot(w_ref[kh * ksize + kw], xs,
                                    preferred_element_type=jnp.float32)

        y_all[i] = acc                                   # keep in VMEM
        stat[0] += jnp.sum(acc, axis=1, keepdims=True)   # (Cout, 1)
        stat[1] += jnp.sum(acc * acc, axis=1, keepdims=True)

    @pl.when(ph == 1)
    def _bn_relu():
        @pl.when(i == 0)
        def _fold_bn():
            m_total = float(n_imgs * hw)
            mean = stat[0] / m_total
            var = jnp.maximum(stat[1] / m_total - mean * mean, 0.0)
            scale = g_ref[...] * jax.lax.rsqrt(var + eps)
            ss[0] = scale
            ss[1] = b_ref[...] - mean * scale

        o_ref[0] = jnp.maximum(y_all[i] * ss[0] + ss[1],
                               0.0).astype(o_ref.dtype)


# --------------------------------- wrapper ---------------------------------- #
@functools.partial(jax.jit, static_argnames=("kernel_size", "eps"))
def conv_norm_act_2d(x_nchw, weight_oikk, gamma, beta, *, kernel_size,
                     eps=1e-5):
    """Fused Conv2d(bias=False, stride=1, padding='same') + BN(train) + ReLU."""
    n, cin, h, w = x_nchw.shape
    cout = weight_oikk.shape[0]
    k = kernel_size
    # TODO(synk): even kernel_size needs PyTorch's asymmetric 'same' padding;
    #             only odd kernel sizes are handled here (module uses K=3).
    p = (k - 1) // 2
    hw = h * w
    lp = (h + 2 * p) * w + 2 * p

    # Zero-pad rows, flatten (H+2p, W) into one axis, pad that axis by p each
    # side so every tap shift is a single static lane offset.  ~1.13x bytes.
    xf = jnp.pad(x_nchw.astype(jnp.float32), ((0, 0), (0, 0), (p, p), (0, 0)))
    xf = xf.reshape(n, cin, (h + 2 * p) * w)
    xf = jnp.pad(xf, ((0, 0), (0, 0), (p, p)))              # (N, Cin, Lp)

    # PyTorch weight (Cout, Cin, kH, kW) -> per-tap matrices (K*K, Cout, Cin)
    w_taps = jnp.transpose(weight_oikk.astype(jnp.float32),
                           (2, 3, 0, 1)).reshape(k * k, cout, cin)
    g2 = gamma.astype(jnp.float32).reshape(cout, 1)
    b2 = beta.astype(jnp.float32).reshape(cout, 1)

    kern = functools.partial(conv_bn_relu_kernel, ksize=k, pad=p, width=w,
                             hw=hw, cout=cout, n_imgs=n, eps=eps)
    flops = 2 * n * hw * (k * k * cin) * cout + 4 * n * cout * hw
    out = pl.pallas_call(
        kern,
        out_shape=jax.ShapeDtypeStruct((n, cout, hw), jnp.float32),
        grid=(2, n),                                    # (phase, batch)
        in_specs=[
            # x is only needed in phase 0; keep its block index constant in
            # phase 1 so it is not re-fetched per step.
            pl.BlockSpec((1, cin, lp), lambda ph, i: (i * (1 - ph), 0, 0)),
            pl.BlockSpec((k * k, cout, cin), lambda ph, i: (0, 0, 0)),
            pl.BlockSpec((cout, 1), lambda ph, i: (0, 0)),
            pl.BlockSpec((cout, 1), lambda ph, i: (0, 0)),
        ],
        # Output is only produced in phase 1; constant block index in phase 0
        # avoids flushing never-written blocks to HBM.
        out_specs=pl.BlockSpec((1, cout, hw), lambda ph, i: (ph * i, 0, 0)),
        scratch_shapes=[
            pltpu.VMEM((n, cout, hw), jnp.float32),     # conv intermediate
            pltpu.VMEM((2, cout, 1), jnp.float32),      # sum / sum-of-squares
            pltpu.VMEM((2, cout, 1), jnp.float32),      # folded scale / shift
        ],
        compiler_params=pltpu.CompilerParams(
            dimension_semantics=("arbitrary", "arbitrary")),
        cost_estimate=pl.CostEstimate(
            flops=flops, transcendentals=cout,
            bytes_accessed=4 * (n * cin * lp + k * k * cout * cin
                                + 2 * cout + n * cout * hw)),
    )(xf, w_taps, g2, b2)

    # TODO(synk): BatchNorm running_mean/var buffers are not updated
    #             (forward output only).
    # (N, Cout, H*W) is already NCHW-ordered: reshape is free, no transpose.
    return out.reshape(n, cout, h, w)


# -------------------------------- reference --------------------------------- #
def _reference(x_nchw, weight_oikk, gamma, beta, eps=1e-5):
    x_nhwc = jnp.transpose(x_nchw, (0, 2, 3, 1)).astype(jnp.float32)
    w_hwio = jnp.transpose(weight_oikk, (2, 3, 1, 0)).astype(jnp.float32)
    y = jax.lax.conv_general_dilated(
        x_nhwc, w_hwio, window_strides=(1, 1), padding="SAME",
        dimension_numbers=("NHWC", "HWIO", "NHWC"))
    mean = y.mean(axis=(0, 1, 2))
    var = ((y - mean) ** 2).mean(axis=(0, 1, 2))
    y = (y - mean) * jax.lax.rsqrt(var + eps) * gamma + beta
    y = jnp.maximum(y, 0.0)
    return jnp.transpose(y, (0, 3, 1, 2))


if __name__ == "__main__":
    # Small shapes consistent with the module.
    N, CIN, H, W = 2, 4, 16, 16
    COUT, K = 8, 3

    key = jax.random.PRNGKey(0)
    kx, kw = jax.random.split(key)

    x = jax.random.normal(kx, (N, CIN, H, W), dtype=jnp.float32)
    # PyTorch conv weight layout: (Cout, Cin, kH, kW).
    weight = 0.1 * jax.random.normal(kw, (COUT, CIN, K, K), dtype=jnp.float32)
    # BatchNorm2d default init: gamma = 1, beta = 0.
    gamma = jnp.ones((COUT,), dtype=jnp.float32)
    beta = jnp.zeros((COUT,), dtype=jnp.float32)

    out = conv_norm_act_2d(x, weight, gamma, beta, kernel_size=K)
    out = jax.block_until_ready(out)

    ref = _reference(x, weight, gamma, beta)
    np.testing.assert_allclose(np.asarray(out), np.asarray(ref),
                               rtol=1e-4, atol=1e-4)

    print("KERNEL_OK")
</pallas_src>

<mosaic_0001>
module attributes {stable_mosaic.version = 11 : i64} {
  func.func @conv_bn_relu_kernel(%arg0: i32, %arg1: i32, %arg2: memref<1x4x290xf32, #tpu.memory_space<vmem>>, %arg3: memref<9x8x4xf32, #tpu.memory_space<vmem>>, %arg4: memref<8x1xf32, #tpu.memory_space<vmem>>, %arg5: memref<8x1xf32, #tpu.memory_space<vmem>>, %arg6: memref<1x8x256xf32, #tpu.memory_space<vmem>>, %arg7: memref<2x8x256xf32, #tpu.memory_space<vmem>>, %arg8: memref<2x8x1xf32, #tpu.memory_space<vmem>>, %arg9: memref<2x8x1xf32, #tpu.memory_space<vmem>>) attributes {dimension_semantics = [#tpu.dimension_semantics<arbitrary>, #tpu.dimension_semantics<arbitrary>], iteration_bounds = array<i64: 2, 2>, scalar_prefetch = 0 : i64, scratch_operands = 3 : i64, tpu.core_type = #tpu.core_type<tc>, window_params = [{transform_indices = @transform_0, window_bounds = array<i64: 1, 4, 290>}, {pipeline_mode = #tpu.pipeline_mode<synchronous>, transform_indices = @transform_1, window_bounds = array<i64: 9, 8, 4>}, {pipeline_mode = #tpu.pipeline_mode<synchronous>, transform_indices = @transform_2, window_bounds = array<i64: 8, 1>}, {pipeline_mode = #tpu.pipeline_mode<synchronous>, transform_indices = @transform_3, window_bounds = array<i64: 8, 1>}, {transform_indices = @transform_4, window_bounds = array<i64: 1, 8, 256>}]} {
    %c0_i32 = arith.constant 0 : i32
    %0 = arith.cmpi eq, %arg0, %c0_i32 : i32
    %1 = arith.extui %0 : i1 to i32
    %c0_i32_0 = arith.constant 0 : i32
    %2 = arith.cmpi ne, %1, %c0_i32_0 : i32
    scf.if %2 {
      %c0_i32_2 = arith.constant 0 : i32
      %6 = arith.cmpi eq, %arg1, %c0_i32_2 : i32
      %7 = arith.extui %6 : i1 to i32
      %c0_i32_3 = arith.constant 0 : i32
      %8 = arith.cmpi ne, %7, %c0_i32_3 : i32
      scf.if %8 {
        %cst_76 = arith.constant 0.000000e+00 : f32
        %128 = vector.broadcast %cst_76 : f32 to vector<2x8x1xf32>
        %c0_77 = arith.constant 0 : index
        %c0_78 = arith.constant 0 : index
        %c0_79 = arith.constant 0 : index
        %129 = vector.load %arg8[%c0_77, %c0_78, %c0_79] : memref<2x8x1xf32, #tpu.memory_space<vmem>>, vector<2x8x1xf32>
        tpu.vector_store %arg8[%c0_77, %c0_78, %c0_79], %128 {strides = array<i32>} : memref<2x8x1xf32, #tpu.memory_space<vmem>>, vector<2x8x1xf32>,
      } else {
      }
      %9 = tpu.iota {dimensions = array<i32: 1>} : vector<1x256xi32>
      %c16_i32 = arith.constant 16 : i32
      %c0_i32_4 = arith.constant 0 : i32
      %10 = arith.cmpi eq, %c16_i32, %c0_i32_4 : i32
      %c1_i32_5 = arith.constant 1 : i32
      %11 = arith.select %10, %c1_i32_5, %c16_i32 : i32
      %12 = vector.broadcast %11 : i32 to vector<1x256xi32>
      %13 = arith.remsi %9, %12 : vector<1x256xi32>
      %c0_i32_6 = arith.constant 0 : i32
      %14 = vector.broadcast %c0_i32_6 : i32 to vector<1x256xi32>
      %15 = arith.cmpi ne, %13, %14 : vector<1x256xi32>
      %c0_i32_7 = arith.constant 0 : i32
      %16 = vector.broadcast %c0_i32_7 : i32 to vector<1x256xi32>
      %17 = arith.cmpi slt, %13, %16 : vector<1x256xi32>
      %c0_i32_8 = arith.constant 0 : i32
      %18 = arith.cmpi slt, %11, %c0_i32_8 : i32
      %19 = vector.broadcast %18 : i1 to vector<1x256xi1>
      %20 = vector.broadcast %19 : vector<1x256xi1> to vector<1x256xi1>
      %21 = arith.xori %17, %20 : vector<1x256xi1>
      %22 = arith.andi %21, %15 : vector<1x256xi1>
      %23 = vector.broadcast %11 : i32 to vector<1x256xi32>
      %24 = arith.addi %13, %23 : vector<1x256xi32>
      %25 = arith.select %22, %24, %13 : vector<1x256xi1>, vector<1x256xi32>
      %c1_i32_9 = arith.constant 1 : i32
      %26 = vector.broadcast %c1_i32_9 : i32 to vector<1x256xi32>
      %27 = arith.cmpi sge, %25, %26 : vector<1x256xi32>
      %c16_i32_10 = arith.constant 16 : i32
      %28 = vector.broadcast %c16_i32_10 : i32 to vector<1x256xi32>
      %29 = arith.cmpi slt, %25, %28 : vector<1x256xi32>
      %30 = arith.andi %27, %29 : vector<1x256xi1>
      %31 = arith.extui %30 : vector<1x256xi1> to vector<1x256xi32>
      %32 = arith.sitofp %31 : vector<1x256xi32> to vector<1x256xf32>
      %c0_i32_11 = arith.constant 0 : i32
      %33 = vector.broadcast %c0_i32_11 : i32 to vector<1x256xi32>
      %34 = arith.cmpi sge, %25, %33 : vector<1x256xi32>
      %c15_i32 = arith.constant 15 : i32
      %35 = vector.broadcast %c15_i32 : i32 to vector<1x256xi32>
      %36 = arith.cmpi slt, %25, %35 : vector<1x256xi32>
      %37 = arith.andi %34, %36 : vector<1x256xi1>
      %38 = arith.extui %37 : vector<1x256xi1> to vector<1x256xi32>
      %39 = arith.sitofp %38 : vector<1x256xi32> to vector<1x256xf32>
      %cst = arith.constant 0.000000e+00 : f32
      %40 = vector.broadcast %cst : f32 to vector<8x256xf32>
      %c0 = arith.constant 0 : index
      %c0_12 = arith.constant 0 : index
      %c0_13 = arith.constant 0 : index
      %41 = vector.load %arg2[%c0, %c0_12, %c0_13] : memref<1x4x290xf32, #tpu.memory_space<vmem>>, vector<1x4x256xf32>
      %42 = vector.shape_cast %41 : vector<1x4x256xf32> to vector<4x256xf32>
      %43 = vector.broadcast %32 : vector<1x256xf32> to vector<4x256xf32>
      %44 = arith.mulf %42, %43 : vector<4x256xf32>
      %c0_14 = arith.constant 0 : index
      %c0_15 = arith.constant 0 : index
      %c0_16 = arith.constant 0 : index
      %45 = vector.load %arg3[%c0_14, %c0_15, %c0_16] : memref<9x8x4xf32, #tpu.memory_space<vmem>>, vector<1x8x4xf32>
      %46 = vector.shape_cast %45 : vector<1x8x4xf32> to vector<8x4xf32>
      %cst_17 = arith.constant dense<0.000000e+00> : vector<8x256xf32>
      %47 = tpu.matmul %46, %44, %cst_17 {dimension_numbers = #tpu.dot_dimension_numbers<[1], [0], [0], [1], [0, 0, 1, 1], [], []>} : vector<8x4xf32>, vector<4x256xf32>, vector<8x256xf32> -> vector<8x256xf32>
      %48 = arith.addf %40, %47 : vector<8x256xf32>
      %c0_18 = arith.constant 0 : index
      %c0_19 = arith.constant 0 : index
      %c1 = arith.constant 1 : index
      %49 = vector.load %arg2[%c0_18, %c0_19, %c1] : memref<1x4x290xf32, #tpu.memory_space<vmem>>, vector<1x4x256xf32>
      %50 = vector.shape_cast %49 : vector<1x4x256xf32> to vector<4x256xf32>
      %c1_20 = arith.constant 1 : index
      %c0_21 = arith.constant 0 : index
      %c0_22 = arith.constant 0 : index
      %51 = vector.load %arg3[%c1_20, %c0_21, %c0_22] : memref<9x8x4xf32, #tpu.memory_space<vmem>>, vector<1x8x4xf32>
      %52 = vector.shape_cast %51 : vector<1x8x4xf32> to vector<8x4xf32>
      %cst_23 = arith.constant dense<0.000000e+00> : vector<8x256xf32>
      %53 = tpu.matmul %52, %50, %cst_23 {dimension_numbers = #tpu.dot_dimension_numbers<[1], [0], [0], [1], [0, 0, 1, 1], [], []>} : vector<8x4xf32>, vector<4x256xf32>, vector<8x256xf32> -> vector<8x256xf32>
      %54 = arith.addf %48, %53 : vector<8x256xf32>
      %c0_24 = arith.constant 0 : index
      %c0_25 = arith.constant 0 : index
      %c2 = arith.constant 2 : index
      %55 = vector.load %arg2[%c0_24, %c0_25, %c2] : memref<1x4x290xf32, #tpu.memory_space<vmem>>, vector<1x4x256xf32>
      %56 = vector.shape_cast %55 : vector<1x4x256xf32> to vector<4x256xf32>
      %57 = vector.broadcast %39 : vector<1x256xf32> to vector<4x256xf32>
      %58 = arith.mulf %56, %57 : vector<4x256xf32>
      %c2_26 = arith.constant 2 : index
      %c0_27 = arith.constant 0 : index
      %c0_28 = arith.constant 0 : index
      %59 = vector.load %arg3[%c2_26, %c0_27, %c0_28] : memref<9x8x4xf32, #tpu.memory_space<vmem>>, vector<1x8x4xf32>
      %60 = vector.shape_cast %59 : vector<1x8x4xf32> to vector<8x4xf32>
      %cst_29 = arith.constant dense<0.000000e+00> : vector<8x256xf32>
      %61 = tpu.matmul %60, %58, %cst_29 {dimension_numbers = #tpu.dot_dimension_numbers<[1], [0], [0], [1], [0, 0, 1, 1], [], []>} : vector<8x4xf32>, vector<4x256xf32>, vector<8x256xf32> -> vector<8x256xf32>
      %62 = arith.addf %54, %61 : vector<8x256xf32>
      %c0_30 = arith.constant 0 : index
      %c0_31 = arith.constant 0 : index
      %c16 = arith.constant 16 : index
      %63 = vector.load %arg2[%c0_30, %c0_31, %c16] : memref<1x4x290xf32, #tpu.memory_space<vmem>>, vector<1x4x256xf32>
      %64 = vector.shape_cast %63 : vector<1x4x256xf32> to vector<4x256xf32>
      %65 = vector.broadcast %32 : vector<1x256xf32> to vector<4x256xf32>
      %66 = arith.mulf %64, %65 : vector<4x256xf32>
      %c3 = arith.constant 3 : index
      %c0_32 = arith.constant 0 : index
      %c0_33 = arith.constant 0 : index
      %67 = vector.load %arg3[%c3, %c0_32, %c0_33] : memref<9x8x4xf32, #tpu.memory_space<vmem>>, vector<1x8x4xf32>
      %68 = vector.shape_cast %67 : vector<1x8x4xf32> to vector<8x4xf32>
      %cst_34 = arith.constant dense<0.000000e+00> : vector<8x256xf32>
      %69 = tpu.matmul %68, %66, %cst_34 {dimension_numbers = #tpu.dot_dimension_numbers<[1], [0], [0], [1], [0, 0, 1, 1], [], []>} : vector<8x4xf32>, vector<4x256xf32>, vector<8x256xf32> -> vector<8x256xf32>
      %70 = arith.addf %62, %69 : vector<8x256xf32>
      %c0_35 = arith.constant 0 : index
      %c0_36 = arith.constant 0 : index
      %c17 = arith.constant 17 : index
      %71 = vector.load %arg2[%c0_35, %c0_36, %c17] : memref<1x4x290xf32, #tpu.memory_space<vmem>>, vector<1x4x256xf32>
      %72 = vector.shape_cast %71 : vector<1x4x256xf32> to vector<4x256xf32>
      %c4 = arith.constant 4 : index
      %c0_37 = arith.constant 0 : index
      %c0_38 = arith.constant 0 : index
      %73 = vector.load %arg3[%c4, %c0_37, %c0_38] : memref<9x8x4xf32, #tpu.memory_space<vmem>>, vector<1x8x4xf32>
      %74 = vector.shape_cast %73 : vector<1x8x4xf32> to vector<8x4xf32>
      %cst_39 = arith.constant dense<0.000000e+00> : vector<8x256xf32>
      %75 = tpu.matmul %74, %72, %cst_39 {dimension_numbers = #tpu.dot_dimension_numbers<[1], [0], [0], [1], [0, 0, 1, 1], [], []>} : vector<8x4xf32>, vector<4x256xf32>, vector<8x256xf32> -> vector<8x256xf32>
      %76 = arith.addf %70, %75 : vector<8x256xf32>
      %c0_40 = arith.constant 0 : index
      %c0_41 = arith.constant 0 : index
      %c18 = arith.constant 18 : index
      %77 = vector.load %arg2[%c0_40, %c0_41, %c18] : memref<1x4x290xf32, #tpu.memory_space<vmem>>, vector<1x4x256xf32>
      %78 = vector.shape_cast %77 : vector<1x4x256xf32> to vector<4x256xf32>
      %79 = vector.broadcast %39 : vector<1x256xf32> to vector<4x256xf32>
      %80 = arith.mulf %78, %79 : vector<4x256xf32>
      %c5 = arith.constant 5 : index
      %c0_42 = arith.constant 0 : index
      %c0_43 = arith.constant 0 : index
      %81 = vector.load %arg3[%c5, %c0_42, %c0_43] : memref<9x8x4xf32, #tpu.memory_space<vmem>>, vector<1x8x4xf32>
      %82 = vector.shape_cast %81 : vector<1x8x4xf32> to vector<8x4xf32>
      %cst_44 = arith.constant dense<0.000000e+00> : vector<8x256xf32>
      %83 = tpu.matmul %82, %80, %cst_44 {dimension_numbers = #tpu.dot_dimension_numbers<[1], [0], [0], [1], [0, 0, 1, 1], [], []>} : vector<8x4xf32>, vector<4x256xf32>, vector<8x256xf32> -> vector<8x256xf32>
      %84 = arith.addf %76, %83 : vector<8x256xf32>
      %c0_45 = arith.constant 0 : index
      %c0_46 = arith.constant 0 : index
      %c32 = arith.constant 32 : index
      %85 = vector.load %arg2[%c0_45, %c0_46, %c32] : memref<1x4x290xf32, #tpu.memory_space<vmem>>, vector<1x4x256xf32>
      %86 = vector.shape_cast %85 : vector<1x4x256xf32> to vector<4x256xf32>
      %87 = vector.broadcast %32 : vector<1x256xf32> to vector<4x256xf32>
      %88 = arith.mulf %86, %87 : vector<4x256xf32>
      %c6 = arith.constant 6 : index
      %c0_47 = arith.constant 0 : index
      %c0_48 = arith.constant 0 : index
      %89 = vector.load %arg3[%c6, %c0_47, %c0_48] : memref<9x8x4xf32, #tpu.memory_space<vmem>>, vector<1x8x4xf32>
      %90 = vector.shape_cast %89 : vector<1x8x4xf32> to vector<8x4xf32>
      %cst_49 = arith.constant dense<0.000000e+00> : vector<8x256xf32>
      %91 = tpu.matmul %90, %88, %cst_49 {dimension_numbers = #tpu.dot_dimension_numbers<[1], [0], [0], [1], [0, 0, 1, 1], [], []>} : vector<8x4xf32>, vector<4x256xf32>, vector<8x256xf32> -> vector<8x256xf32>
      %92 = arith.addf %84, %91 : vector<8x256xf32>
      %c0_50 = arith.constant 0 : index
      %c0_51 = arith.constant 0 : index
      %c33 = arith.constant 33 : index
      %93 = vector.load %arg2[%c0_50, %c0_51, %c33] : memref<1x4x290xf32, #tpu.memory_space<vmem>>, vector<1x4x256xf32>
      %94 = vector.shape_cast %93 : vector<1x4x256xf32> to vector<4x256xf32>
      %c7 = arith.constant 7 : index
      %c0_52 = arith.constant 0 : index
      %c0_53 = arith.constant 0 : index
      %95 = vector.load %arg3[%c7, %c0_52, %c0_53] : memref<9x8x4xf32, #tpu.memory_space<vmem>>, vector<1x8x4xf32>
      %96 = vector.shape_cast %95 : vector<1x8x4xf32> to vector<8x4xf32>
      %cst_54 = arith.constant dense<0.000000e+00> : vector<8x256xf32>
      %97 = tpu.matmul %96, %94, %cst_54 {dimension_numbers = #tpu.dot_dimension_numbers<[1], [0], [0], [1], [0, 0, 1, 1], [], []>} : vector<8x4xf32>, vector<4x256xf32>, vector<8x256xf32> -> vector<8x256xf32>
      %98 = arith.addf %92, %97 : vector<8x256xf32>
      %c0_55 = arith.constant 0 : index
      %c0_56 = arith.constant 0 : index
      %c34 = arith.constant 34 : index
      %99 = vector.load %arg2[%c0_55, %c0_56, %c34] : memref<1x4x290xf32, #tpu.memory_space<vmem>>, vector<1x4x256xf32>
      %100 = vector.shape_cast %99 : vector<1x4x256xf32> to vector<4x256xf32>
      %101 = vector.broadcast %39 : vector<1x256xf32> to vector<4x256xf32>
      %102 = arith.mulf %100, %101 : vector<4x256xf32>
      %c8 = arith.constant 8 : index
      %c0_57 = arith.constant 0 : index
      %c0_58 = arith.constant 0 : index
      %103 = vector.load %arg3[%c8, %c0_57, %c0_58] : memref<9x8x4xf32, #tpu.memory_space<vmem>>, vector<1x8x4xf32>
      %104 = vector.shape_cast %103 : vector<1x8x4xf32> to vector<8x4xf32>
      %cst_59 = arith.constant dense<0.000000e+00> : vector<8x256xf32>
      %105 = tpu.matmul %104, %102, %cst_59 {dimension_numbers = #tpu.dot_dimension_numbers<[1], [0], [0], [1], [0, 0, 1, 1], [], []>} : vector<8x4xf32>, vector<4x256xf32>, vector<8x256xf32> -> vector<8x256xf32>
      %106 = arith.addf %98, %105 : vector<8x256xf32>
      %107 = arith.index_cast %arg1 : i32 to index
      %c0_60 = arith.constant 0 : index
      %c0_61 = arith.constant 0 : index
      %108 = vector.load %arg7[%107, %c0_60, %c0_61] : memref<2x8x256xf32, #tpu.memory_space<vmem>>, vector<1x8x256xf32>
      %109 = vector.shape_cast %108 : vector<1x8x256xf32> to vector<8x256xf32>
      %110 = vector.shape_cast %106 : vector<8x256xf32> to vector<1x8x256xf32>
      tpu.vector_store %arg7[%107, %c0_60, %c0_61], %110 {strides = array<i32>} : memref<2x8x256xf32, #tpu.memory_space<vmem>>, vector<1x8x256xf32>,
      %c0_62 = arith.constant 0 : index
      %c0_63 = arith.constant 0 : index
      %c0_64 = arith.constant 0 : index
      %111 = vector.load %arg8[%c0_62, %c0_63, %c0_64] : memref<2x8x1xf32, #tpu.memory_space<vmem>>, vector<1x8x1xf32>
      %112 = vector.shape_cast %111 : vector<1x8x1xf32> to vector<8x1xf32>
      %cst_65 = arith.constant dense<0.000000e+00> : vector<8xf32>
      %113 = vector.multi_reduction <add>, %106, %cst_65 [1] : vector<8x256xf32> to vector<8xf32>
      %114 = vector.shape_cast %113 : vector<8xf32> to vector<8x1xf32>
      %115 = arith.addf %112, %114 : vector<8x1xf32>
      %c0_66 = arith.constant 0 : index
      %c0_67 = arith.constant 0 : index
      %c0_68 = arith.constant 0 : index
      %116 = vector.load %arg8[%c0_66, %c0_67, %c0_68] : memref<2x8x1xf32, #tpu.memory_space<vmem>>, vector<1x8x1xf32>
      %117 = vector.shape_cast %116 : vector<1x8x1xf32> to vector<8x1xf32>
      %118 = vector.shape_cast %115 : vector<8x1xf32> to vector<1x8x1xf32>
      tpu.vector_store %arg8[%c0_66, %c0_67, %c0_68], %118 {strides = array<i32>} : memref<2x8x1xf32, #tpu.memory_space<vmem>>, vector<1x8x1xf32>,
      %c1_69 = arith.constant 1 : index
      %c0_70 = arith.constant 0 : index
      %c0_71 = arith.constant 0 : index
      %119 = vector.load %arg8[%c1_69, %c0_70, %c0_71] : memref<2x8x1xf32, #tpu.memory_space<vmem>>, vector<1x8x1xf32>
      %120 = vector.shape_cast %119 : vector<1x8x1xf32> to vector<8x1xf32>
      %121 = arith.mulf %106, %106 : vector<8x256xf32>
      %cst_72 = arith.constant dense<0.000000e+00> : vector<8xf32>
      %122 = vector.multi_reduction <add>, %121, %cst_72 [1] : vector<8x256xf32> to vector<8xf32>
      %123 = vector.shape_cast %122 : vector<8xf32> to vector<8x1xf32>
      %124 = arith.addf %120, %123 : vector<8x1xf32>
      %c1_73 = arith.constant 1 : index
      %c0_74 = arith.constant 0 : index
      %c0_75 = arith.constant 0 : index
      %125 = vector.load %arg8[%c1_73, %c0_74, %c0_75] : memref<2x8x1xf32, #tpu.memory_space<vmem>>, vector<1x8x1xf32>
      %126 = vector.shape_cast %125 : vector<1x8x1xf32> to vector<8x1xf32>
      %127 = vector.shape_cast %124 : vector<8x1xf32> to vector<1x8x1xf32>
      tpu.vector_store %arg8[%c1_73, %c0_74, %c0_75], %127 {strides = array<i32>} : memref<2x8x1xf32, #tpu.memory_space<vmem>>, vector<1x8x1xf32>,
    } else {
    }
    %c1_i32 = arith.constant 1 : i32
    %3 = arith.cmpi eq, %arg0, %c1_i32 : i32
    %4 = arith.extui %3 : i1 to i32
    %c0_i32_1 = arith.constant 0 : i32
    %5 = arith.cmpi ne, %4, %c0_i32_1 : i32
    scf.if %5 {
      %c0_i32_2 = arith.constant 0 : i32
      %6 = arith.cmpi eq, %arg1, %c0_i32_2 : i32
      %7 = arith.extui %6 : i1 to i32
      %c0_i32_3 = arith.constant 0 : i32
      %8 = arith.cmpi ne, %7, %c0_i32_3 : i32
      scf.if %8 {
        %c0_13 = arith.constant 0 : index
        %c0_14 = arith.constant 0 : index
        %c0_15 = arith.constant 0 : index
        %25 = vector.load %arg8[%c0_13, %c0_14, %c0_15] : memref<2x8x1xf32, #tpu.memory_space<vmem>>, vector<1x8x1xf32>
        %26 = vector.shape_cast %25 : vector<1x8x1xf32> to vector<8x1xf32>
        %cst_16 = arith.constant 5.120000e+02 : f32
        %27 = vector.broadcast %cst_16 : f32 to vector<8x1xf32>
        %28 = arith.divf %26, %27 : vector<8x1xf32>
        %c1_17 = arith.constant 1 : index
        %c0_18 = arith.constant 0 : index
        %c0_19 = arith.constant 0 : index
        %29 = vector.load %arg8[%c1_17, %c0_18, %c0_19] : memref<2x8x1xf32, #tpu.memory_space<vmem>>, vector<1x8x1xf32>
        %30 = vector.shape_cast %29 : vector<1x8x1xf32> to vector<8x1xf32>
        %cst_20 = arith.constant 5.120000e+02 : f32
        %31 = vector.broadcast %cst_20 : f32 to vector<8x1xf32>
        %32 = arith.divf %30, %31 : vector<8x1xf32>
        %33 = arith.mulf %28, %28 : vector<8x1xf32>
        %34 = arith.subf %32, %33 : vector<8x1xf32>
        %cst_21 = arith.constant 0.000000e+00 : f32
        %35 = vector.broadcast %cst_21 : f32 to vector<8x1xf32>
        %36 = arith.maximumf %34, %35 : vector<8x1xf32>
        %c0_22 = arith.constant 0 : index
        %c0_23 = arith.constant 0 : index
        %37 = vector.load %arg4[%c0_22, %c0_23] : memref<8x1xf32, #tpu.memory_space<vmem>>, vector<8x1xf32>
        %cst_24 = arith.constant 9.99999974E-6 : f32
        %38 = vector.broadcast %cst_24 : f32 to vector<8x1xf32>
        %39 = arith.addf %36, %38 : vector<8x1xf32>
        %40 = math.rsqrt %39 : vector<8x1xf32>
        %41 = arith.mulf %37, %40 : vector<8x1xf32>
        %c0_25 = arith.constant 0 : index
        %c0_26 = arith.constant 0 : index
        %c0_27 = arith.constant 0 : index
        %42 = vector.load %arg9[%c0_25, %c0_26, %c0_27] : memref<2x8x1xf32, #tpu.memory_space<vmem>>, vector<1x8x1xf32>
        %43 = vector.shape_cast %42 : vector<1x8x1xf32> to vector<8x1xf32>
        %44 = vector.shape_cast %41 : vector<8x1xf32> to vector<1x8x1xf32>
        tpu.vector_store %arg9[%c0_25, %c0_26, %c0_27], %44 {strides = array<i32>} : memref<2x8x1xf32, #tpu.memory_space<vmem>>, vector<1x8x1xf32>,
        %c0_28 = arith.constant 0 : index
        %c0_29 = arith.constant 0 : index
        %45 = vector.load %arg5[%c0_28, %c0_29] : memref<8x1xf32, #tpu.memory_space<vmem>>, vector<8x1xf32>
        %46 = arith.mulf %28, %41 : vector<8x1xf32>
        %47 = arith.subf %45, %46 : vector<8x1xf32>
        %c1_30 = arith.constant 1 : index
        %c0_31 = arith.constant 0 : index
        %c0_32 = arith.constant 0 : index
        %48 = vector.load %arg9[%c1_30, %c0_31, %c0_32] : memref<2x8x1xf32, #tpu.memory_space<vmem>>, vector<1x8x1xf32>
        %49 = vector.shape_cast %48 : vector<1x8x1xf32> to vector<8x1xf32>
        %50 = vector.shape_cast %47 : vector<8x1xf32> to vector<1x8x1xf32>
        tpu.vector_store %arg9[%c1_30, %c0_31, %c0_32], %50 {strides = array<i32>} : memref<2x8x1xf32, #tpu.memory_space<vmem>>, vector<1x8x1xf32>,
      } else {
      }
      %9 = arith.index_cast %arg1 : i32 to index
      %c0 = arith.constant 0 : index
      %c0_4 = arith.constant 0 : index
      %10 = vector.load %arg7[%9, %c0, %c0_4] : memref<2x8x256xf32, #tpu.memory_space<vmem>>, vector<1x8x256xf32>
      %11 = vector.shape_cast %10 : vector<1x8x256xf32> to vector<8x256xf32>
      %c0_5 = arith.constant 0 : index
      %c0_6 = arith.constant 0 : index
      %c0_7 = arith.constant 0 : index
      %12 = vector.load %arg9[%c0_5, %c0_6, %c0_7] : memref<2x8x1xf32, #tpu.memory_space<vmem>>, vector<1x8x1xf32>
      %13 = vector.shape_cast %12 : vector<1x8x1xf32> to vector<8x1xf32>
      %14 = vector.broadcast %13 : vector<8x1xf32> to vector<8x256xf32>
      %15 = arith.mulf %11, %14 : vector<8x256xf32>
      %c1 = arith.constant 1 : index
      %c0_8 = arith.constant 0 : index
      %c0_9 = arith.constant 0 : index
      %16 = vector.load %arg9[%c1, %c0_8, %c0_9] : memref<2x8x1xf32, #tpu.memory_space<vmem>>, vector<1x8x1xf32>
      %17 = vector.shape_cast %16 : vector<1x8x1xf32> to vector<8x1xf32>
      %18 = vector.broadcast %17 : vector<8x1xf32> to vector<8x256xf32>
      %19 = arith.addf %15, %18 : vector<8x256xf32>
      %cst = arith.constant 0.000000e+00 : f32
      %20 = vector.broadcast %cst : f32 to vector<8x256xf32>
      %21 = arith.maximumf %19, %20 : vector<8x256xf32>
      %c0_10 = arith.constant 0 : index
      %c0_11 = arith.constant 0 : index
      %c0_12 = arith.constant 0 : index
      %22 = vector.load %arg6[%c0_10, %c0_11, %c0_12] : memref<1x8x256xf32, #tpu.memory_space<vmem>>, vector<1x8x256xf32>
      %23 = vector.shape_cast %22 : vector<1x8x256xf32> to vector<8x256xf32>
      %24 = vector.shape_cast %21 : vector<8x256xf32> to vector<1x8x256xf32>
      tpu.vector_store %arg6[%c0_10, %c0_11, %c0_12], %24 {strides = array<i32>} : memref<1x8x256xf32, #tpu.memory_space<vmem>>, vector<1x8x256xf32>,
    } else {
    }
    return
  }
  func.func @transform_0(%arg0: i32, %arg1: i32) -> (i32, i32, i32) {
    %c1_i32 = arith.constant 1 : i32
    %0 = arith.subi %c1_i32, %arg0 : i32
    %1 = arith.muli %arg1, %0 : i32
    %c0_i32 = arith.constant 0 : i32
    %c0_i32_0 = arith.constant 0 : i32
    %c0_i32_1 = arith.constant 0 : i32
    return %1, %c0_i32, %c0_i32_0 : i32, i32, i32
  }
  func.func @transform_1(%arg0: i32, %arg1: i32) -> (i32, i32, i32) {
    %c0_i32 = arith.constant 0 : i32
    %c0_i32_0 = arith.constant 0 : i32
    %c0_i32_1 = arith.constant 0 : i32
    %c0_i32_2 = arith.constant 0 : i32
    return %c0_i32, %c0_i32_0, %c0_i32_1 : i32, i32, i32
  }
  func.func @transform_2(%arg0: i32, %arg1: i32) -> (i32, i32) {
    %c0_i32 = arith.constant 0 : i32
    %c0_i32_0 = arith.constant 0 : i32
    %c0_i32_1 = arith.constant 0 : i32
    return %c0_i32, %c0_i32_0 : i32, i32
  }
  func.func @transform_3(%arg0: i32, %arg1: i32) -> (i32, i32) {
    %c0_i32 = arith.constant 0 : i32
    %c0_i32_0 = arith.constant 0 : i32
    %c0_i32_1 = arith.constant 0 : i32
    return %c0_i32, %c0_i32_0 : i32, i32
  }
  func.func @transform_4(%arg0: i32, %arg1: i32) -> (i32, i32, i32) {
    %0 = arith.muli %arg0, %arg1 : i32
    %c0_i32 = arith.constant 0 : i32
    %c0_i32_0 = arith.constant 0 : i32
    %c0_i32_1 = arith.constant 0 : i32
    return %0, %c0_i32, %c0_i32_0 : i32, i32, i32
  }
}

</mosaic_0001>

<llo_original>
// kernel: conv_norm_act_2d.1
$region0: #{conv_norm_act_2d.1}
  #allocation0 [shape = 'u32[]', space=smem, size = 0x4, offset = 0x4, fixed_abs, tag = 'smem constant byte address 0x4 - core index']
  #allocation1 [shape = 'u32[72,128]{1,0:T(1,128)}', space=vmem, size = 0x9000, scoped, tag = 'internal scratch']
  #allocation2 [shape = 'f32[2,8,256]{2,1,0:T(8,128)}', space=vmem, size = 0x4000, scoped, tag = 'scratch operand']
  #allocation3 [shape = 'f32[2,8,1]{2,1,0:T(8,128)}', space=vmem, size = 0x2000, scoped, tag = 'scratch operand']
  #allocation4 [shape = 'f32[2,8,1]{2,1,0:T(8,128)}', space=vmem, size = 0x2000, scoped, tag = 'scratch operand']
  %s0 = inlined_call_operand.vmem [shape: f32[2,4,290], index: 0, kind: input, shape index: {}]
  %s1 = inlined_call_operand.vmem [shape: f32[9,8,4], index: 1, kind: input, shape index: {}]
  %s2 = inlined_call_operand.vmem [shape: f32[8,1], index: 2, kind: input, shape index: {}]
  %s3 = inlined_call_operand.vmem [shape: f32[8,1], index: 3, kind: input, shape index: {}]
  %s4 = inlined_call_operand.vmem [shape: f32[2,8,256], index: 4, kind: output, shape index: {}]
  %s5 = sld [smem:[#allocation0]]
  $region65: #{conv_norm_act_2d.1} parent=0
    _
  %s7 = ssub.s32 1, %s5
  %s8 = scalar_select 0, %s7, %s5
  loop: start=0, step=1, limit=6
  $region2: #{conv_norm_act_2d.1} parent=0 // loop_pre_header
    _
  $region3: #{conv_norm_act_2d.1} parent=0 // loop_header
    %s10 = sphi 0, %s14
    %p11 = scmp.ge.s32.totalorder %s10, 6
    %s17 = sphi 0, %s29
    %s18 = sphi 0, %s25
    %s19 = sphi 0, %s17
    %s20 = sphi 0, %s18
    %s21 = sphi 0, %s19
    %s22 = sphi 0, %s20
    %s36 = sphi 0, %s38
    %s39 = sphi 0, %s36
    %s40 = sphi 0, %s39
    %s56 = sphi 0, %s40
    %s60 = sphi 0, %s60
    %s62 = sphi 0, %s60
    %s63 = sphi 0, %s62
    %s77 = sphi 0, %s63
    %s81 = sphi 0, %s81
    %s83 = sphi 0, %s81
    %s84 = sphi 0, %s83
    %s98 = sphi 0, %s84
    %s102 = sphi 0, %s102
    %s104 = sphi 0, %s102
    %s105 = sphi 0, %s104
    %s119 = sphi 0, %s105
    %s127 = sphi 0, %s129
    %s130 = sphi 0, %s127
    %s131 = sphi 0, %s130
    %s147 = sphi 0, %s131
  $region4: #{conv_norm_act_2d.1} parent=0 // loop_header_branch
    %13 = sbr.rel (%p11) target = $region8
  $region5: #{conv_norm_act_2d.1} parent=0 // loop_body
    %s15 = ssub.s32 %s10, 1
    %s16 = ssub.s32 %s10, 2
    %s23 = sadd.s32 1, %s18
    %p24 = scmp.ge.s32.totalorder %s23, 2
    %s25 = scalar_select %p24, 0, %s23
    %s26 = sadd.s32 1, %s17
    %s27 = scalar_select %p24, %s26, %s17
    %p28 = scmp.ge.s32.totalorder %s27, 2
    %s29 = scalar_select %p28, 0, %s27
    %s30 = ssub.s32 1, %s17
    %s31 = smul.u32 %s18, %s30
    %s32 = ssub.s32 1, %s29
    %s33 = smul.u32 %s25, %s32
    %s34 = ssub.s32 %s31, %s33
    %p35 = scmp.eq.s32.totalorder %s34, 0
    %s37 = sadd.s32 %s36, 1
    %s38 = scalar_select %p35, %s36, %s37
    %p41 = pneg %p35
    %p42 = scmp.eq.s32.totalorder %s10, 3
    %p43 = por %p41, %p42
    %p44 = scmp.ne.s32.totalorder %s36, %s39
    %p45 = scmp.eq.s32.totalorder %s10, 0
    %p46 = por %p44, %p45
    %p47 = scmp.ne.s32.totalorder %s36, %s39
    %p48 = scmp.eq.s32.totalorder %s15, 3
    %p49 = por %p47, %p48
    %p50 = scmp.ne.s32.totalorder %s39, %s40
    %p51 = scmp.eq.s32.totalorder %s15, 0
    %p52 = por %p50, %p51
    %p53 = scmp.ne.s32.totalorder %s39, %s40
    %p54 = scmp.eq.s32.totalorder %s16, 3
    %p55 = por %p53, %p54
    %p57 = scmp.ne.s32.totalorder %s40, %s56
    %p58 = scmp.eq.s32.totalorder %s16, 0
    %p59 = por %p57, %p58
    %s61 = sadd.s32 %s60, 1
    %p64 = scmp.eq.s32.totalorder %s10, 3
    %p65 = scmp.ne.s32.totalorder %s60, %s62
    %p66 = scmp.eq.s32.totalorder %s10, 0
    %p67 = por %p65, %p66
    %p68 = scmp.ne.s32.totalorder %s60, %s62
    %p69 = scmp.eq.s32.totalorder %s15, 3
    %p70 = por %p68, %p69
    %p71 = scmp.ne.s32.totalorder %s62, %s63
    %p72 = scmp.eq.s32.totalorder %s15, 0
    %p73 = por %p71, %p72
    %p74 = scmp.ne.s32.totalorder %s62, %s63
    %p75 = scmp.eq.s32.totalorder %s16, 3
    %p76 = por %p74, %p75
    %p78 = scmp.ne.s32.totalorder %s63, %s77
    %p79 = scmp.eq.s32.totalorder %s16, 0
    %p80 = por %p78, %p79
    %s82 = sadd.s32 %s81, 1
    %p85 = scmp.eq.s32.totalorder %s10, 3
    %p86 = scmp.ne.s32.totalorder %s81, %s83
    %p87 = scmp.eq.s32.totalorder %s10, 0
    %p88 = por %p86, %p87
    %p89 = scmp.ne.s32.totalorder %s81, %s83
    %p90 = scmp.eq.s32.totalorder %s15, 3
    %p91 = por %p89, %p90
    %p92 = scmp.ne.s32.totalorder %s83, %s84
    %p93 = scmp.eq.s32.totalorder %s15, 0
    %p94 = por %p92, %p93
    %p95 = scmp.ne.s32.totalorder %s83, %s84
    %p96 = scmp.eq.s32.totalorder %s16, 3
    %p97 = por %p95, %p96
    %p99 = scmp.ne.s32.totalorder %s84, %s98
    %p100 = scmp.eq.s32.totalorder %s16, 0
    %p101 = por %p99, %p100
    %s103 = sadd.s32 %s102, 1
    %p106 = scmp.eq.s32.totalorder %s10, 3
    %p107 = scmp.ne.s32.totalorder %s102, %s104
    %p108 = scmp.eq.s32.totalorder %s10, 0
    %p109 = por %p107, %p108
    %p110 = scmp.ne.s32.totalorder %s102, %s104
    %p111 = scmp.eq.s32.totalorder %s15, 3
    %p112 = por %p110, %p111
    %p113 = scmp.ne.s32.totalorder %s104, %s105
    %p114 = scmp.eq.s32.totalorder %s15, 0
    %p115 = por %p113, %p114
    %p116 = scmp.ne.s32.totalorder %s104, %s105
    %p117 = scmp.eq.s32.totalorder %s16, 3
    %p118 = por %p116, %p117
    %p120 = scmp.ne.s32.totalorder %s105, %s119
    %p121 = scmp.eq.s32.totalorder %s16, 0
    %p122 = por %p120, %p121
    %s123 = smul.u32 %s17, %s18
    %s124 = smul.u32 %s29, %s25
    %s125 = ssub.s32 %s123, %s124
    %p126 = scmp.eq.s32.totalorder %s125, 0
    %s128 = sadd.s32 %s127, 1
    %s129 = scalar_select %p126, %s127, %s128
    %p132 = pneg %p126
    %p133 = scmp.eq.s32.totalorder %s10, 3
    %p134 = por %p132, %p133
    %p135 = scmp.ne.s32.totalorder %s127, %s130
    %p136 = scmp.eq.s32.totalorder %s10, 0
    %p137 = por %p135, %p136
    %p138 = scmp.ne.s32.totalorder %s127, %s130
    %p139 = scmp.eq.s32.totalorder %s15, 3
    %p140 = por %p138, %p139
    %p141 = scmp.ne.s32.totalorder %s130, %s131
    %p142 = scmp.eq.s32.totalorder %s15, 0
    %p143 = por %p141, %p142
    %p144 = scmp.ne.s32.totalorder %s130, %s131
    %p145 = scmp.eq.s32.totalorder %s16, 3
    %p146 = por %p144, %p145
    %p148 = scmp.ne.s32.totalorder %s131, %s147
    %p149 = scmp.eq.s32.totalorder %s16, 0
    %p150 = por %p148, %p149
    %p151 = scmp.le.s32.totalorder 1, %s10
    %p152 = scmp.lt.s32.totalorder %s10, 5
    %p153 = pnand %p151, %p152
    %p154 = pneg %p153
    // Predicated region
    $region9: #{conv_norm_act_2d.1} parent=5 // pred_check
      _
    $region10: #{conv_norm_act_2d.1} parent=5 // pred_check_branch
      %156 = sbr.rel (%p153) target = $region12
    $region11: #{conv_norm_act_2d.1} parent=5 // pred_region
      %s157 = ssub.s32 %s10, 1
      // Predicated region
      $region13: #{conv_norm_act_2d.1} parent=11 // pred_check
        %p158 = pneg %p73
      $region14: #{conv_norm_act_2d.1} parent=11 // pred_check_branch
        %160 = sbr.rel (%p158) target = $region16
      $region15: #{conv_norm_act_2d.1} parent=11 // pred_region
        _
      $region16: #{conv_norm_act_2d.1} parent=11 // pred_fallthru
        _
      // Predicated region
      $region17: #{conv_norm_act_2d.1} parent=11 // pred_check
        %p161 = pneg %p94
      $region18: #{conv_norm_act_2d.1} parent=11 // pred_check_branch
        %163 = sbr.rel (%p161) target = $region20
      $region19: #{conv_norm_act_2d.1} parent=11 // pred_region
        _
      $region20: #{conv_norm_act_2d.1} parent=11 // pred_fallthru
        _
      // Predicated region
      $region21: #{conv_norm_act_2d.1} parent=11 // pred_check
        %p164 = pneg %p115
      $region22: #{conv_norm_act_2d.1} parent=11 // pred_check_branch
        %166 = sbr.rel (%p164) target = $region24
      $region23: #{conv_norm_act_2d.1} parent=11 // pred_region
        _
      $region24: #{conv_norm_act_2d.1} parent=11 // pred_fallthru
        _
    $region12: #{conv_norm_act_2d.1} parent=5 // pred_fallthru
      _
    %p167 = scmp.lt.s32.totalorder %s10, 4
    // Predicated region
    $region25: #{conv_norm_act_2d.1} parent=5 // pred_check
      %p168 = pneg %p167
    $region26: #{conv_norm_act_2d.1} parent=5 // pred_check_branch
      %170 = sbr.rel (%p168) target = $region28
    $region27: #{conv_norm_act_2d.1} parent=5 // pred_region
      // Predicated region
      $region29: #{conv_norm_act_2d.1} parent=27 // pred_check
        %p171 = pneg %p46
      $region30: #{conv_norm_act_2d.1} parent=27 // pred_check_branch
        %173 = sbr.rel (%p171) target = $region32
      $region31: #{conv_norm_act_2d.1} parent=27 // pred_region
        %s174 = ssub.s32 1, %s17
        %s175 = smul.u32 %s18, %s174
        %p176 = scmp.lt.s32.totalorder %s175, 1
        %s177 = scalar_select %p176, %s175, 1
        %s178 = smul.addr %s177, 3
        %s179 = smul.addr %s178, 4
        %s180 = scalar_lea.vmem %s0, %s179
        %s181 = ssub.s32 1, %s17
        %s182 = smul.u32 %s18, %s181
      $region32: #{conv_norm_act_2d.1} parent=27 // pred_fallthru
        _
    $region28: #{conv_norm_act_2d.1} parent=5 // pred_fallthru
      _
    %p183 = scmp.le.s32.totalorder 1, %s10
    %p184 = scmp.lt.s32.totalorder %s10, 5
    %p185 = pnand %p183, %p184
    %p186 = pneg %p185
    // Predicated region
    $region33: #{conv_norm_act_2d.1} parent=5 // pred_check
      _
    $region34: #{conv_norm_act_2d.1} parent=5 // pred_check_branch
      %188 = sbr.rel (%p185) target = $region36
    $region35: #{conv_norm_act_2d.1} parent=5 // pred_region
      %s189 = ssub.s32 %s10, 1
      %s190 = ssub.s32 1, %s19
      %s191 = smul.u32 %s20, %s190
      %p192 = scmp.lt.s32.totalorder %s191, 1
      %s193 = scalar_select %p192, %s191, 1
      %s194 = smul.addr %s193, 3
      %s195 = smul.addr %s194, 4
      %s196 = scalar_lea.vmem %s0, %s195
      %p197 = pneg %p52
      %p198 = pneg %p49
      %p199 = pneg %p73
      %p200 = pneg %p70
      %p201 = pneg %p94
      %p202 = pneg %p91
      %p203 = pneg %p115
      %p204 = pneg %p112
      %p205 = pneg %p143
      %p206 = pneg %p140
      %s207 = smul.u32 %s19, %s20
      %p208 = scmp.lt.s32.totalorder %s207, 1
      %s209 = scalar_select %p208, %s207, 1
      %s210 = smul.addr %s209, 2
      %s211 = smul.addr %s210, 8
      %s212 = scalar_lea.vmem %s4, %s211
      %s213 = ssub.s32 1, %s19
      %s214 = smul.u32 %s20, %s213
      %p215 = scmp.lt.s32.totalorder %s214, 1
      %s216 = scalar_select %p215, %s214, 1
      %s217 = smul.addr %s216, 3
      %s218 = smul.addr %s217, 4
      %s219 = scalar_lea.vmem %s0, %s218
      %s220 = ssub.s32 1, %s19
      %s221 = smul.u32 %s20, %s220
      %s222 = smul.u32 %s19, %s20
      %p223 = scmp.lt.s32.totalorder %s222, 1
      %s224 = scalar_select %p223, %s222, 1
      %s225 = smul.addr %s224, 2
      %s226 = smul.addr %s225, 8
      %s227 = scalar_lea.vmem %s4, %s226
      %s228 = smul.u32 %s19, %s20
      %p229 = scmp.eq.s32.totalorder %s19, 0
      // Predicated region
      $region37: #{conv_norm_act_2d.1} parent=35 // pred_check
        %p230 = pneg %p229
      $region38: #{conv_norm_act_2d.1} parent=35 // pred_check_branch
        %232 = sbr.rel (%p230) target = $region40
      $region39: #{conv_norm_act_2d.1} parent=35 // pred_region
        %p233 = scmp.eq.s32.totalorder %s20, 0
        // Predicated region
        $region41: #{conv_norm_act_2d.1} parent=39 // pred_check
          %p234 = pneg %p233
        $region42: #{conv_norm_act_2d.1} parent=39 // pred_check_branch
          %236 = sbr.rel (%p234) target = $region44
        $region43: #{conv_norm_act_2d.1} parent=39 // pred_region
          %vm237 = vcmask 7168
          %238 = vst.msk [vmem:[#allocation3] sm:$0xff] %vm237, 0.0
          %239 = vst.msk [vmem:[#allocation3 + $0x8] sm:$0xff] %vm237, 0.0
        $region44: #{conv_norm_act_2d.1} parent=39 // pred_fallthru
          _
        %v240 = vlaneseq
        %v241 = vand.u32 %v240, 127
        %v242 = vadd.s32 %v241, 128
        %vm243 = vcmp.lt.s32.totalorder %v241, 0
        %v244 = vsub.s32 0, %v241
        %v245 = vsel %vm243, %v244, %v241
        %v246 = vshrl.u32 %v245, 4
        %v247 = vand.u32 %v245, 15
        %v248 = vsub.s32 0, %v247
        %v249 = vsel %vm243, %v248, %v247
        %vm250 = vcmp.lt.s32.totalorder %v242, 0
        %v251 = vsub.s32 0, %v242
        %v252 = vsel %vm250, %v251, %v242
        %v253 = vshrl.u32 %v252, 4
        %v254 = vand.u32 %v252, 15
        %v255 = vsub.s32 0, %v254
        %v256 = vsel %vm250, %v255, %v254
        %vm257 = vcmp.ne.s32.totalorder %v249, 0
        %vm258 = vcmp.ne.s32.totalorder %v256, 0
        %vm259 = vcmp.lt.s32.totalorder %v249, 0
        %vm260 = vcmp.lt.s32.totalorder %v256, 0
        %vm261 = vmand %vm259, %vm257
        %vm262 = vmand %vm260, %vm258
        %v263 = vadd.s32 %v249, 16
        %v264 = vadd.s32 %v256, 16
        %v265 = vsel %vm261, %v263, %v249
        %v266 = vsel %vm262, %v264, %v256
        %vm267 = vcmp.ge.s32.totalorder %v265, 1
        %vm268 = vcmp.ge.s32.totalorder %v266, 1
        %vm269 = vcmp.lt.s32.totalorder %v265, 16
        %vm270 = vcmp.lt.s32.totalorder %v266, 16
        %vm271 = vmand %vm267, %vm269
        %vm272 = vmand %vm268, %vm270
        %v273 = vsel %vm271, 1, 0
        %v274 = vsel %vm272, 1, 0
        %v275 = vcvt.s32.f32 %v273
        %v276 = vcvt.s32.f32 %v274
        %vm277 = vcmp.ge.s32.totalorder %v265, 0
        %vm278 = vcmp.ge.s32.totalorder %v266, 0
        %vm279 = vcmp.lt.s32.totalorder %v265, 15
        %vm280 = vcmp.lt.s32.totalorder %v266, 15
        %vm281 = vmand %vm277, %vm279
        %vm282 = vmand %vm278, %vm280
        %v283 = vsel %vm281, 1, 0
        %v284 = vsel %vm282, 1, 0
        %v285 = vcvt.s32.f32 %v283
        %v286 = vcvt.s32.f32 %v284
        %v287 = vld [vmem:[%s219] sm:$0xff]
        %v290 = vrot.slane %v276, 4
        %vm291 = vcmask 1043456
        %v292 = vsel %vm291, %v275, %v290
        %v294 = vmul.f32 %v287, %v292
        %v295 = vld [vmem:[%s1] sm:$0xff]
        %v296 = vld [vmem:[%s219 + $0x8] sm:$0xf]
        %s297 = scalar_lea.vmem %s1, 8
        %v298 = vld [vmem:[%s297] sm:$0xff]
        %301 = vst [vmem:[#allocation1] ss:$2 sm:$0xff] %v287
        %s302 = scalar_lea.vmem [#allocation1], 16
        %303 = vst [vmem:[%s302] ss:$2 sm:$0xff] %v296
        %v304 = vld.sshfl [vmem:[#allocation1] sm:$0xff pattern:$0x75316420]
        %v305 = vld.sshfl [vmem:[#allocation1 + $0x8] sm:$0xff pattern:$0x75316420]
        %v306 = vld.sshfl [vmem:[#allocation1 + $0x10] sm:$0xff pattern:$0x75316420]
        %307 = vrot.lane.b32.xlu0 %v304, 127
        %v308 = vpop.permute.xlu0 %307
        %309 = vrot.lane.b32.xlu0 %v305, 127
        %v310 = vpop.permute.xlu0 %309
        %311 = vrot.lane.b32.xlu0 %v306, 127
        %v312 = vpop.permute.xlu0 %311
        %vm313 = vcmask 1039360
        %v314 = vsel %vm313, %v308, %v310
        %v315 = vsel %vm313, %v310, %v312
        %vm316 = vcmask 31744
        %v318 = vsel %vm316, %v298, 0
        %v320 = vsel %vm291, %v314, 0
        %v322 = vsel %vm291, %v315, 0
        %324 = vmatpush.msra.mxu0 0.0
        %325 = vmatpush.msra.mxu0 0.0
        %326 = vmatpush.msra.mxu0 0.0
        %327 = vmatpush.msra.mxu0 0.0
        %328 = vmatpush.msra.mxu0 0.0
        %329 = vmatpush.msra.mxu0 0.0
        %330 = vmatpush.msra.mxu0 0.0
        %331 = vmatpush.msra.mxu0 0.0
        %332 = vmatpush.msra.mxu0 0.0
        %333 = vmatpush.msra.mxu0 0.0
        %334 = vmatpush.msra.mxu0 0.0
        %335 = vmatpush.msra.mxu0 0.0
        %336 = vmatpush.msra.mxu0 0.0
        %337 = vmatpush.msra.mxu0 0.0
        %338 = vmatpush.msra.mxu0 0.0
        %339 = vmatpush.msra.mxu0 %v320
        %340 = vmatmul.f32.gmra.mxu0 %v318
        %v341 = vpop.f32.mrf.mxu0
        %v342 = vadd.f32 0.0, %v341
        %343 = vdwg.mxu0
        %344 = vmatpush.msra.mxu0 0.0
        %345 = vmatpush.msra.mxu0 0.0
        %346 = vmatpush.msra.mxu0 0.0
        %347 = vmatpush.msra.mxu0 0.0
        %348 = vmatpush.msra.mxu0 0.0
        %349 = vmatpush.msra.mxu0 0.0
        %350 = vmatpush.msra.mxu0 0.0
        %351 = vmatpush.msra.mxu0 0.0
        %352 = vmatpush.msra.mxu0 0.0
        %353 = vmatpush.msra.mxu0 0.0
        %354 = vmatpush.msra.mxu0 0.0
        %355 = vmatpush.msra.mxu0 0.0
        %356 = vmatpush.msra.mxu0 0.0
        %357 = vmatpush.msra.mxu0 0.0
        %358 = vmatpush.msra.mxu0 0.0
        %359 = vmatpush.msra.mxu0 %v322
        %360 = vmatmul.f32.gmra.mxu0 %v318
        %v361 = vpop.f32.mrf.mxu0
        %v362 = vadd.f32 0.0, %v361
        %363 = vdwg.mxu0
        %365 = vst [vmem:[#allocation1] ss:$2 sm:$0xff] %v294
        %v366 = vld.sshfl [vmem:[#allocation1] sm:$0xff pattern:$0x75316420]
        %v367 = vld.sshfl [vmem:[#allocation1 + $0x8] sm:$0xff pattern:$0x75316420]
        %v369 = vsel %vm316, %v295, 0
        %v371 = vsel %vm291, %v366, 0
        %v373 = vsel %vm291, %v367, 0
        %375 = vmatpush.msra.mxu0 0.0
        %376 = vmatpush.msra.mxu0 0.0
        %377 = vmatpush.msra.mxu0 0.0
        %378 = vmatpush.msra.mxu0 0.0
        %379 = vmatpush.msra.mxu0 0.0
        %380 = vmatpush.msra.mxu0 0.0
        %381 = vmatpush.msra.mxu0 0.0
        %382 = vmatpush.msra.mxu0 0.0
        %383 = vmatpush.msra.mxu0 0.0
        %384 = vmatpush.msra.mxu0 0.0
        %385 = vmatpush.msra.mxu0 0.0
        %386 = vmatpush.msra.mxu0 0.0
        %387 = vmatpush.msra.mxu0 0.0
        %388 = vmatpush.msra.mxu0 0.0
        %389 = vmatpush.msra.mxu0 0.0
        %390 = vmatpush.msra.mxu0 %v371
        %391 = vmatmul.f32.gmra.mxu0 %v369
        %v392 = vpop.f32.mrf.mxu0
        %v393 = vadd.f32 %v342, %v392
        %394 = vdwg.mxu0
        %395 = vmatpush.msra.mxu0 0.0
        %396 = vmatpush.msra.mxu0 0.0
        %397 = vmatpush.msra.mxu0 0.0
        %398 = vmatpush.msra.mxu0 0.0
        %399 = vmatpush.msra.mxu0 0.0
        %400 = vmatpush.msra.mxu0 0.0
        %401 = vmatpush.msra.mxu0 0.0
        %402 = vmatpush.msra.mxu0 0.0
        %403 = vmatpush.msra.mxu0 0.0
        %404 = vmatpush.msra.mxu0 0.0
        %405 = vmatpush.msra.mxu0 0.0
        %406 = vmatpush.msra.mxu0 0.0
        %407 = vmatpush.msra.mxu0 0.0
        %408 = vmatpush.msra.mxu0 0.0
        %409 = vmatpush.msra.mxu0 0.0
        %410 = vmatpush.msra.mxu0 %v373
        %411 = vmatmul.f32.gmra.mxu0 %v369
        %v412 = vpop.f32.mrf.mxu0
        %v413 = vadd.f32 %v362, %v412
        %414 = vdwg.mxu0
        %v415 = vld [vmem:[%s219] sm:$0xff]
        %v416 = vld [vmem:[%s219 + $0x8] sm:$0xf]
        %v419 = vrot.slane %v286, 4
        %v420 = vsel %vm291, %v285, %v419
        %421 = vrot.lane.b32.xlu0 %v420, 2
        %v422 = vpop.permute.xlu0 %421
        %v423 = vrot.slane %v422, 4
        %vm424 = vcmask 15360
        %v425 = vsel %vm424, %v423, %v422
        %v428 = vmul.f32 %v415, %v425
        %v429 = vmul.f32 %v416, %v423
        %s430 = scalar_lea.vmem %s1, 16
        %v431 = vld [vmem:[%s430] sm:$0xff]
        %434 = vst [vmem:[#allocation1] ss:$2 sm:$0xff] %v428
        %s435 = scalar_lea.vmem [#allocation1], 16
        %436 = vst [vmem:[%s435] ss:$2 sm:$0xff] %v429
        %v437 = vld.sshfl [vmem:[#allocation1] sm:$0xff pattern:$0x75316420]
        %v438 = vld.sshfl [vmem:[#allocation1 + $0x8] sm:$0xff pattern:$0x75316420]
        %v439 = vld.sshfl [vmem:[#allocation1 + $0x10] sm:$0xff pattern:$0x75316420]
        %440 = vrot.lane.b32.xlu0 %v437, 126
        %v441 = vpop.permute.xlu0 %440
        %442 = vrot.lane.b32.xlu0 %v438, 126
        %v443 = vpop.permute.xlu0 %442
        %444 = vrot.lane.b32.xlu0 %v439, 126
        %v445 = vpop.permute.xlu0 %444
        %vm446 = vcmask 1031168
        %v447 = vsel %vm446, %v441, %v443
        %v448 = vsel %vm446, %v443, %v445
        %v450 = vsel %vm316, %v431, 0
        %v452 = vsel %vm291, %v447, 0
        %v454 = vsel %vm291, %v448, 0
        %456 = vmatpush.msra.mxu0 0.0
        %457 = vmatpush.msra.mxu0 0.0
        %458 = vmatpush.msra.mxu0 0.0
        %459 = vmatpush.msra.mxu0 0.0
        %460 = vmatpush.msra.mxu0 0.0
        %461 = vmatpush.msra.mxu0 0.0
        %462 = vmatpush.msra.mxu0 0.0
        %463 = vmatpush.msra.mxu0 0.0
        %464 = vmatpush.msra.mxu0 0.0
        %465 = vmatpush.msra.mxu0 0.0
        %466 = vmatpush.msra.mxu0 0.0
        %467 = vmatpush.msra.mxu0 0.0
        %468 = vmatpush.msra.mxu0 0.0
        %469 = vmatpush.msra.mxu0 0.0
        %470 = vmatpush.msra.mxu0 0.0
        %471 = vmatpush.msra.mxu0 %v452
        %472 = vmatmul.f32.gmra.mxu0 %v450
        %v473 = vpop.f32.mrf.mxu0
        %v474 = vadd.f32 0.0, %v473
        %475 = vdwg.mxu0
        %476 = vmatpush.msra.mxu0 0.0
        %477 = vmatpush.msra.mxu0 0.0
        %478 = vmatpush.msra.mxu0 0.0
        %479 = vmatpush.msra.mxu0 0.0
        %480 = vmatpush.msra.mxu0 0.0
        %481 = vmatpush.msra.mxu0 0.0
        %482 = vmatpush.msra.mxu0 0.0
        %483 = vmatpush.msra.mxu0 0.0
        %484 = vmatpush.msra.mxu0 0.0
        %485 = vmatpush.msra.mxu0 0.0
        %486 = vmatpush.msra.mxu0 0.0
        %487 = vmatpush.msra.mxu0 0.0
        %488 = vmatpush.msra.mxu0 0.0
        %489 = vmatpush.msra.mxu0 0.0
        %490 = vmatpush.msra.mxu0 0.0
        %491 = vmatpush.msra.mxu0 %v454
        %492 = vmatmul.f32.gmra.mxu0 %v450
        %v493 = vpop.f32.mrf.mxu0
        %v494 = vadd.f32 0.0, %v493
        %495 = vdwg.mxu0
        %v496 = vadd.f32 %v393, %v474
        %v497 = vadd.f32 %v413, %v494
        %v498 = vld [vmem:[%s219] sm:$0xff]
        %v499 = vld [vmem:[%s219 + $0x8] sm:$0xf]
        %500 = vrot.lane.b32.xlu0 %v292, 16
        %v501 = vpop.permute.xlu0 %500
        %v502 = vrot.slane %v501, 4
        %vm503 = vcmask 130048
        %v504 = vsel %vm503, %v502, %v501
        %v507 = vmul.f32 %v498, %v504
        %v508 = vmul.f32 %v499, %v502
        %s509 = scalar_lea.vmem %s1, 24
        %v510 = vld [vmem:[%s509] sm:$0xff]
        %513 = vst [vmem:[#allocation1] ss:$2 sm:$0xff] %v507
        %s514 = scalar_lea.vmem [#allocation1], 16
        %515 = vst [vmem:[%s514] ss:$2 sm:$0xff] %v508
        %v516 = vld.sshfl [vmem:[#allocation1] sm:$0xff pattern:$0x75316420]
        %v517 = vld.sshfl [vmem:[#allocation1 + $0x8] sm:$0xff pattern:$0x75316420]
        %v518 = vld.sshfl [vmem:[#allocation1 + $0x10] sm:$0xff pattern:$0x75316420]
        %519 = vrot.lane.b32.xlu0 %v516, 112
        %v520 = vpop.permute.xlu0 %519
        %521 = vrot.lane.b32.xlu0 %v517, 112
        %v522 = vpop.permute.xlu0 %521
        %523 = vrot.lane.b32.xlu0 %v518, 112
        %v524 = vpop.permute.xlu0 %523
        %vm525 = vcmask 916480
        %v526 = vsel %vm525, %v520, %v522
        %v527 = vsel %vm525, %v522, %v524
        %v529 = vsel %vm316, %v510, 0
        %v531 = vsel %vm291, %v526, 0
        %v533 = vsel %vm291, %v527, 0
        %535 = vmatpush.msra.mxu0 0.0
        %536 = vmatpush.msra.mxu0 0.0
        %537 = vmatpush.msra.mxu0 0.0
        %538 = vmatpush.msra.mxu0 0.0
        %539 = vmatpush.msra.mxu0 0.0
        %540 = vmatpush.msra.mxu0 0.0
        %541 = vmatpush.msra.mxu0 0.0
        %542 = vmatpush.msra.mxu0 0.0
        %543 = vmatpush.msra.mxu0 0.0
        %544 = vmatpush.msra.mxu0 0.0
        %545 = vmatpush.msra.mxu0 0.0
        %546 = vmatpush.msra.mxu0 0.0
        %547 = vmatpush.msra.mxu0 0.0
        %548 = vmatpush.msra.mxu0 0.0
        %549 = vmatpush.msra.mxu0 0.0
        %550 = vmatpush.msra.mxu0 %v531
        %551 = vmatmul.f32.gmra.mxu0 %v529
        %v552 = vpop.f32.mrf.mxu0
        %v553 = vadd.f32 0.0, %v552
        %554 = vdwg.mxu0
        %555 = vmatpush.msra.mxu0 0.0
        %556 = vmatpush.msra.mxu0 0.0
        %557 = vmatpush.msra.mxu0 0.0
        %558 = vmatpush.msra.mxu0 0.0
        %559 = vmatpush.msra.mxu0 0.0
        %560 = vmatpush.msra.mxu0 0.0
        %561 = vmatpush.msra.mxu0 0.0
        %562 = vmatpush.msra.mxu0 0.0
        %563 = vmatpush.msra.mxu0 0.0
        %564 = vmatpush.msra.mxu0 0.0
        %565 = vmatpush.msra.mxu0 0.0
        %566 = vmatpush.msra.mxu0 0.0
        %567 = vmatpush.msra.mxu0 0.0
        %568 = vmatpush.msra.mxu0 0.0
        %569 = vmatpush.msra.mxu0 0.0
        %570 = vmatpush.msra.mxu0 %v533
        %571 = vmatmul.f32.gmra.mxu0 %v529
        %v572 = vpop.f32.mrf.mxu0
        %v573 = vadd.f32 0.0, %v572
        %574 = vdwg.mxu0
        %v575 = vadd.f32 %v496, %v553
        %v576 = vadd.f32 %v497, %v573
        %v577 = vld [vmem:[%s219] sm:$0xff]
        %v578 = vld [vmem:[%s219 + $0x8] sm:$0xf]
        %s579 = scalar_lea.vmem %s1, 32
        %v580 = vld [vmem:[%s579] sm:$0xff]
        %583 = vst [vmem:[#allocation1] ss:$2 sm:$0xff] %v577
        %s584 = scalar_lea.vmem [#allocation1], 16
        %585 = vst [vmem:[%s584] ss:$2 sm:$0xff] %v578
        %v586 = vld.sshfl [vmem:[#allocation1] sm:$0xff pattern:$0x75316420]
        %v587 = vld.sshfl [vmem:[#allocation1 + $0x8] sm:$0xff pattern:$0x75316420]
        %v588 = vld.sshfl [vmem:[#allocation1 + $0x10] sm:$0xff pattern:$0x75316420]
        %589 = vrot.lane.b32.xlu0 %v586, 111
        %v590 = vpop.permute.xlu0 %589
        %591 = vrot.lane.b32.xlu0 %v587, 111
        %v592 = vpop.permute.xlu0 %591
        %593 = vrot.lane.b32.xlu0 %v588, 111
        %v594 = vpop.permute.xlu0 %593
        %vm595 = vcmask 908288
        %v596 = vsel %vm595, %v590, %v592
        %v597 = vsel %vm595, %v592, %v594
        %v599 = vsel %vm316, %v580, 0
        %v601 = vsel %vm291, %v596, 0
        %v603 = vsel %vm291, %v597, 0
        %605 = vmatpush.msra.mxu0 0.0
        %606 = vmatpush.msra.mxu0 0.0
        %607 = vmatpush.msra.mxu0 0.0
        %608 = vmatpush.msra.mxu0 0.0
        %609 = vmatpush.msra.mxu0 0.0
        %610 = vmatpush.msra.mxu0 0.0
        %611 = vmatpush.msra.mxu0 0.0
        %612 = vmatpush.msra.mxu0 0.0
        %613 = vmatpush.msra.mxu0 0.0
        %614 = vmatpush.msra.mxu0 0.0
        %615 = vmatpush.msra.mxu0 0.0
        %616 = vmatpush.msra.mxu0 0.0
        %617 = vmatpush.msra.mxu0 0.0
        %618 = vmatpush.msra.mxu0 0.0
        %619 = vmatpush.msra.mxu0 0.0
        %620 = vmatpush.msra.mxu0 %v601
        %621 = vmatmul.f32.gmra.mxu0 %v599
        %v622 = vpop.f32.mrf.mxu0
        %v623 = vadd.f32 0.0, %v622
        %624 = vdwg.mxu0
        %625 = vmatpush.msra.mxu0 0.0
        %626 = vmatpush.msra.mxu0 0.0
        %627 = vmatpush.msra.mxu0 0.0
        %628 = vmatpush.msra.mxu0 0.0
        %629 = vmatpush.msra.mxu0 0.0
        %630 = vmatpush.msra.mxu0 0.0
        %631 = vmatpush.msra.mxu0 0.0
        %632 = vmatpush.msra.mxu0 0.0
        %633 = vmatpush.msra.mxu0 0.0
        %634 = vmatpush.msra.mxu0 0.0
        %635 = vmatpush.msra.mxu0 0.0
        %636 = vmatpush.msra.mxu0 0.0
        %637 = vmatpush.msra.mxu0 0.0
        %638 = vmatpush.msra.mxu0 0.0
        %639 = vmatpush.msra.mxu0 0.0
        %640 = vmatpush.msra.mxu0 %v603
        %641 = vmatmul.f32.gmra.mxu0 %v599
        %v642 = vpop.f32.mrf.mxu0
        %v643 = vadd.f32 0.0, %v642
        %644 = vdwg.mxu0
        %v645 = vadd.f32 %v575, %v623
        %v646 = vadd.f32 %v576, %v643
        %v647 = vld [vmem:[%s219] sm:$0xff]
        %v648 = vld [vmem:[%s219 + $0x8] sm:$0xf]
        %649 = vrot.lane.b32.xlu0 %v420, 18
        %v650 = vpop.permute.xlu0 %649
        %v651 = vrot.slane %v650, 4
        %vm652 = vcmask 146432
        %v653 = vsel %vm652, %v651, %v650
        %v656 = vmul.f32 %v647, %v653
        %v657 = vmul.f32 %v648, %v651
        %s658 = scalar_lea.vmem %s1, 40
        %v659 = vld [vmem:[%s658] sm:$0xff]
        %662 = vst [vmem:[#allocation1] ss:$2 sm:$0xff] %v656
        %s663 = scalar_lea.vmem [#allocation1], 16
        %664 = vst [vmem:[%s663] ss:$2 sm:$0xff] %v657
        %v665 = vld.sshfl [vmem:[#allocation1] sm:$0xff pattern:$0x75316420]
        %v666 = vld.sshfl [vmem:[#allocation1 + $0x8] sm:$0xff pattern:$0x75316420]
        %v667 = vld.sshfl [vmem:[#allocation1 + $0x10] sm:$0xff pattern:$0x75316420]
        %668 = vrot.lane.b32.xlu0 %v665, 110
        %v669 = vpop.permute.xlu0 %668
        %670 = vrot.lane.b32.xlu0 %v666, 110
        %v671 = vpop.permute.xlu0 %670
        %672 = vrot.lane.b32.xlu0 %v667, 110
        %v673 = vpop.permute.xlu0 %672
        %vm674 = vcmask 900096
        %v675 = vsel %vm674, %v669, %v671
        %v676 = vsel %vm674, %v671, %v673
        %v678 = vsel %vm316, %v659, 0
        %v680 = vsel %vm291, %v675, 0
        %v682 = vsel %vm291, %v676, 0
        %684 = vmatpush.msra.mxu0 0.0
        %685 = vmatpush.msra.mxu0 0.0
        %686 = vmatpush.msra.mxu0 0.0
        %687 = vmatpush.msra.mxu0 0.0
        %688 = vmatpush.msra.mxu0 0.0
        %689 = vmatpush.msra.mxu0 0.0
        %690 = vmatpush.msra.mxu0 0.0
        %691 = vmatpush.msra.mxu0 0.0
        %692 = vmatpush.msra.mxu0 0.0
        %693 = vmatpush.msra.mxu0 0.0
        %694 = vmatpush.msra.mxu0 0.0
        %695 = vmatpush.msra.mxu0 0.0
        %696 = vmatpush.msra.mxu0 0.0
        %697 = vmatpush.msra.mxu0 0.0
        %698 = vmatpush.msra.mxu0 0.0
        %699 = vmatpush.msra.mxu0 %v680
        %700 = vmatmul.f32.gmra.mxu0 %v678
        %v701 = vpop.f32.mrf.mxu0
        %v702 = vadd.f32 0.0, %v701
        %703 = vdwg.mxu0
        %704 = vmatpush.msra.mxu0 0.0
        %705 = vmatpush.msra.mxu0 0.0
        %706 = vmatpush.msra.mxu0 0.0
        %707 = vmatpush.msra.mxu0 0.0
        %708 = vmatpush.msra.mxu0 0.0
        %709 = vmatpush.msra.mxu0 0.0
        %710 = vmatpush.msra.mxu0 0.0
        %711 = vmatpush.msra.mxu0 0.0
        %712 = vmatpush.msra.mxu0 0.0
        %713 = vmatpush.msra.mxu0 0.0
        %714 = vmatpush.msra.mxu0 0.0
        %715 = vmatpush.msra.mxu0 0.0
        %716 = vmatpush.msra.mxu0 0.0
        %717 = vmatpush.msra.mxu0 0.0
        %718 = vmatpush.msra.mxu0 0.0
        %719 = vmatpush.msra.mxu0 %v682
        %720 = vmatmul.f32.gmra.mxu0 %v678
        %v721 = vpop.f32.mrf.mxu0
        %v722 = vadd.f32 0.0, %v721
        %723 = vdwg.mxu0
        %v724 = vadd.f32 %v645, %v702
        %v725 = vadd.f32 %v646, %v722
        %v726 = vld [vmem:[%s219] sm:$0xff]
        %v727 = vld [vmem:[%s219 + $0x8] sm:$0xf]
        %728 = vrot.lane.b32.xlu0 %v292, 32
        %v729 = vpop.permute.xlu0 %728
        %v730 = vrot.slane %v729, 4
        %vm731 = vcmask 261120
        %v732 = vsel %vm731, %v730, %v729
        %v735 = vmul.f32 %v726, %v732
        %v736 = vmul.f32 %v727, %v730
        %s737 = scalar_lea.vmem %s1, 48
        %v738 = vld [vmem:[%s737] sm:$0xff]
        %741 = vst [vmem:[#allocation1] ss:$2 sm:$0xff] %v735
        %s742 = scalar_lea.vmem [#allocation1], 16
        %743 = vst [vmem:[%s742] ss:$2 sm:$0xff] %v736
        %v744 = vld.sshfl [vmem:[#allocation1] sm:$0xff pattern:$0x75316420]
        %v745 = vld.sshfl [vmem:[#allocation1 + $0x8] sm:$0xff pattern:$0x75316420]
        %v746 = vld.sshfl [vmem:[#allocation1 + $0x10] sm:$0xff pattern:$0x75316420]
        %747 = vrot.lane.b32.xlu0 %v744, 96
        %v748 = vpop.permute.xlu0 %747
        %749 = vrot.lane.b32.xlu0 %v745, 96
        %v750 = vpop.permute.xlu0 %749
        %751 = vrot.lane.b32.xlu0 %v746, 96
        %v752 = vpop.permute.xlu0 %751
        %vm753 = vcmask 785408
        %v754 = vsel %vm753, %v748, %v750
        %v755 = vsel %vm753, %v750, %v752
        %v757 = vsel %vm316, %v738, 0
        %v759 = vsel %vm291, %v754, 0
        %v761 = vsel %vm291, %v755, 0
        %763 = vmatpush.msra.mxu0 0.0
        %764 = vmatpush.msra.mxu0 0.0
        %765 = vmatpush.msra.mxu0 0.0
        %766 = vmatpush.msra.mxu0 0.0
        %767 = vmatpush.msra.mxu0 0.0
        %768 = vmatpush.msra.mxu0 0.0
        %769 = vmatpush.msra.mxu0 0.0
        %770 = vmatpush.msra.mxu0 0.0
        %771 = vmatpush.msra.mxu0 0.0
        %772 = vmatpush.msra.mxu0 0.0
        %773 = vmatpush.msra.mxu0 0.0
        %774 = vmatpush.msra.mxu0 0.0
        %775 = vmatpush.msra.mxu0 0.0
        %776 = vmatpush.msra.mxu0 0.0
        %777 = vmatpush.msra.mxu0 0.0
        %778 = vmatpush.msra.mxu0 %v759
        %779 = vmatmul.f32.gmra.mxu0 %v757
        %v780 = vpop.f32.mrf.mxu0
        %v781 = vadd.f32 0.0, %v780
        %782 = vdwg.mxu0
        %783 = vmatpush.msra.mxu0 0.0
        %784 = vmatpush.msra.mxu0 0.0
        %785 = vmatpush.msra.mxu0 0.0
        %786 = vmatpush.msra.mxu0 0.0
        %787 = vmatpush.msra.mxu0 0.0
        %788 = vmatpush.msra.mxu0 0.0
        %789 = vmatpush.msra.mxu0 0.0
        %790 = vmatpush.msra.mxu0 0.0
        %791 = vmatpush.msra.mxu0 0.0
        %792 = vmatpush.msra.mxu0 0.0
        %793 = vmatpush.msra.mxu0 0.0
        %794 = vmatpush.msra.mxu0 0.0
        %795 = vmatpush.msra.mxu0 0.0
        %796 = vmatpush.msra.mxu0 0.0
        %797 = vmatpush.msra.mxu0 0.0
        %798 = vmatpush.msra.mxu0 %v761
        %799 = vmatmul.f32.gmra.mxu0 %v757
        %v800 = vpop.f32.mrf.mxu0
        %v801 = vadd.f32 0.0, %v800
        %802 = vdwg.mxu0
        %v803 = vadd.f32 %v724, %v781
        %v804 = vadd.f32 %v725, %v801
        %v805 = vld [vmem:[%s219] sm:$0xff]
        %v806 = vld [vmem:[%s219 + $0x8] sm:$0xf]
        %s807 = scalar_lea.vmem %s1, 56
        %v808 = vld [vmem:[%s807] sm:$0xff]
        %811 = vst [vmem:[#allocation1] ss:$2 sm:$0xff] %v805
        %s812 = scalar_lea.vmem [#allocation1], 16
        %813 = vst [vmem:[%s812] ss:$2 sm:$0xff] %v806
        %v814 = vld.sshfl [vmem:[#allocation1] sm:$0xff pattern:$0x75316420]
        %v815 = vld.sshfl [vmem:[#allocation1 + $0x8] sm:$0xff pattern:$0x75316420]
        %v816 = vld.sshfl [vmem:[#allocation1 + $0x10] sm:$0xff pattern:$0x75316420]
        %817 = vrot.lane.b32.xlu0 %v814, 95
        %v818 = vpop.permute.xlu0 %817
        %819 = vrot.lane.b32.xlu0 %v815, 95
        %v820 = vpop.permute.xlu0 %819
        %821 = vrot.lane.b32.xlu0 %v816, 95
        %v822 = vpop.permute.xlu0 %821
        %vm823 = vcmask 777216
        %v824 = vsel %vm823, %v818, %v820
        %v825 = vsel %vm823, %v820, %v822
        %v827 = vsel %vm316, %v808, 0
        %v829 = vsel %vm291, %v824, 0
        %v831 = vsel %vm291, %v825, 0
        %833 = vmatpush.msra.mxu0 0.0
        %834 = vmatpush.msra.mxu0 0.0
        %835 = vmatpush.msra.mxu0 0.0
        %836 = vmatpush.msra.mxu0 0.0
        %837 = vmatpush.msra.mxu0 0.0
        %838 = vmatpush.msra.mxu0 0.0
        %839 = vmatpush.msra.mxu0 0.0
        %840 = vmatpush.msra.mxu0 0.0
        %841 = vmatpush.msra.mxu0 0.0
        %842 = vmatpush.msra.mxu0 0.0
        %843 = vmatpush.msra.mxu0 0.0
        %844 = vmatpush.msra.mxu0 0.0
        %845 = vmatpush.msra.mxu0 0.0
        %846 = vmatpush.msra.mxu0 0.0
        %847 = vmatpush.msra.mxu0 0.0
        %848 = vmatpush.msra.mxu0 %v829
        %849 = vmatmul.f32.gmra.mxu0 %v827
        %v850 = vpop.f32.mrf.mxu0
        %v851 = vadd.f32 0.0, %v850
        %852 = vdwg.mxu0
        %853 = vmatpush.msra.mxu0 0.0
        %854 = vmatpush.msra.mxu0 0.0
        %855 = vmatpush.msra.mxu0 0.0
        %856 = vmatpush.msra.mxu0 0.0
        %857 = vmatpush.msra.mxu0 0.0
        %858 = vmatpush.msra.mxu0 0.0
        %859 = vmatpush.msra.mxu0 0.0
        %860 = vmatpush.msra.mxu0 0.0
        %861 = vmatpush.msra.mxu0 0.0
        %862 = vmatpush.msra.mxu0 0.0
        %863 = vmatpush.msra.mxu0 0.0
        %864 = vmatpush.msra.mxu0 0.0
        %865 = vmatpush.msra.mxu0 0.0
        %866 = vmatpush.msra.mxu0 0.0
        %867 = vmatpush.msra.mxu0 0.0
        %868 = vmatpush.msra.mxu0 %v831
        %869 = vmatmul.f32.gmra.mxu0 %v827
        %v870 = vpop.f32.mrf.mxu0
        %v871 = vadd.f32 0.0, %v870
        %872 = vdwg.mxu0
        %v873 = vadd.f32 %v803, %v851
        %v874 = vadd.f32 %v804, %v871
        %v875 = vld [vmem:[%s219] sm:$0xff]
        %v876 = vld [vmem:[%s219 + $0x8] sm:$0xf]
        %877 = vrot.lane.b32.xlu0 %v420, 34
        %v878 = vpop.permute.xlu0 %877
        %v879 = vrot.slane %v878, 4
        %vm880 = vcmask 277504
        %v881 = vsel %vm880, %v879, %v878
        %v884 = vmul.f32 %v875, %v881
        %v885 = vmul.f32 %v876, %v879
        %s886 = scalar_lea.vmem %s1, 64
        %v887 = vld [vmem:[%s886] sm:$0xff]
        %890 = vst [vmem:[#allocation1] ss:$2 sm:$0xff] %v884
        %s891 = scalar_lea.vmem [#allocation1], 16
        %892 = vst [vmem:[%s891] ss:$2 sm:$0xff] %v885
        %v893 = vld.sshfl [vmem:[#allocation1] sm:$0xff pattern:$0x75316420]
        %v894 = vld.sshfl [vmem:[#allocation1 + $0x8] sm:$0xff pattern:$0x75316420]
        %v895 = vld.sshfl [vmem:[#allocation1 + $0x10] sm:$0xff pattern:$0x75316420]
        %896 = vrot.lane.b32.xlu0 %v893, 94
        %v897 = vpop.permute.xlu0 %896
        %898 = vrot.lane.b32.xlu0 %v894, 94
        %v899 = vpop.permute.xlu0 %898
        %900 = vrot.lane.b32.xlu0 %v895, 94
        %v901 = vpop.permute.xlu0 %900
        %vm902 = vcmask 769024
        %v903 = vsel %vm902, %v897, %v899
        %v904 = vsel %vm902, %v899, %v901
        %v906 = vsel %vm316, %v887, 0
        %v908 = vsel %vm291, %v903, 0
        %v910 = vsel %vm291, %v904, 0
        %912 = vmatpush.msra.mxu0 0.0
        %913 = vmatpush.msra.mxu0 0.0
        %914 = vmatpush.msra.mxu0 0.0
        %915 = vmatpush.msra.mxu0 0.0
        %916 = vmatpush.msra.mxu0 0.0
        %917 = vmatpush.msra.mxu0 0.0
        %918 = vmatpush.msra.mxu0 0.0
        %919 = vmatpush.msra.mxu0 0.0
        %920 = vmatpush.msra.mxu0 0.0
        %921 = vmatpush.msra.mxu0 0.0
        %922 = vmatpush.msra.mxu0 0.0
        %923 = vmatpush.msra.mxu0 0.0
        %924 = vmatpush.msra.mxu0 0.0
        %925 = vmatpush.msra.mxu0 0.0
        %926 = vmatpush.msra.mxu0 0.0
        %927 = vmatpush.msra.mxu0 %v908
        %928 = vmatmul.f32.gmra.mxu0 %v906
        %v929 = vpop.f32.mrf.mxu0
        %v930 = vadd.f32 0.0, %v929
        %931 = vdwg.mxu0
        %932 = vmatpush.msra.mxu0 0.0
        %933 = vmatpush.msra.mxu0 0.0
        %934 = vmatpush.msra.mxu0 0.0
        %935 = vmatpush.msra.mxu0 0.0
        %936 = vmatpush.msra.mxu0 0.0
        %937 = vmatpush.msra.mxu0 0.0
        %938 = vmatpush.msra.mxu0 0.0
        %939 = vmatpush.msra.mxu0 0.0
        %940 = vmatpush.msra.mxu0 0.0
        %941 = vmatpush.msra.mxu0 0.0
        %942 = vmatpush.msra.mxu0 0.0
        %943 = vmatpush.msra.mxu0 0.0
        %944 = vmatpush.msra.mxu0 0.0
        %945 = vmatpush.msra.mxu0 0.0
        %946 = vmatpush.msra.mxu0 0.0
        %947 = vmatpush.msra.mxu0 %v910
        %948 = vmatmul.f32.gmra.mxu0 %v906
        %v949 = vpop.f32.mrf.mxu0
        %v950 = vadd.f32 0.0, %v949
        %951 = vdwg.mxu0
        %v952 = vadd.f32 %v873, %v930
        %v953 = vadd.f32 %v874, %v950
        %s954 = smul.u32 %s20, 2
        %s955 = smul.addr %s954, 8
        %s956 = scalar_lea.vmem [#allocation2], %s955
        %957 = vst [vmem:[%s956] sm:$0xff] %v952
        %958 = vst [vmem:[%s956 + $0x8] sm:$0xff] %v953
        %v959 = vld [vmem:[#allocation3] sm:$0xff]
        %v960 = vadd.f32 %v952, %v953
        %961 = vadd.xlane.f32.xlu0 %v960
        %v962 = vpop.xlane.xlu0 %961
        %v963 = vadd.f32 %v959, %v962
        %vm964 = vcmask 7168
        %965 = vst.msk [vmem:[#allocation3] sm:$0xff] %vm964, %v963
        %s966 = scalar_lea.vmem [#allocation3], 8
        %v967 = vld [vmem:[%s966] sm:$0xff]
        %v968 = vmul.f32 %v952, %v952
        %v969 = vmul.f32 %v953, %v953
        %v970 = vadd.f32 %v968, %v969
        %971 = vadd.xlane.f32.xlu0 %v970
        %v972 = vpop.xlane.xlu0 %971
        %v973 = vadd.f32 %v967, %v972
        %974 = vst.msk [vmem:[%s966] sm:$0xff] %vm964, %v973
      $region40: #{conv_norm_act_2d.1} parent=35 // pred_fallthru
        _
      %p975 = scmp.eq.s32.totalorder %s19, 1
      // Predicated region
      $region45: #{conv_norm_act_2d.1} parent=35 // pred_check
        %p976 = pneg %p975
      $region46: #{conv_norm_act_2d.1} parent=35 // pred_check_branch
        %978 = sbr.rel (%p976) target = $region48
      $region47: #{conv_norm_act_2d.1} parent=35 // pred_region
        %p979 = scmp.eq.s32.totalorder %s20, 0
        // Predicated region
        $region49: #{conv_norm_act_2d.1} parent=47 // pred_check
          %p980 = pneg %p979
        $region50: #{conv_norm_act_2d.1} parent=47 // pred_check_branch
          %982 = sbr.rel (%p980) target = $region52
        $region51: #{conv_norm_act_2d.1} parent=47 // pred_region
          %v983 = vld [vmem:[#allocation3] sm:$0xff]
          %v984 = vrcp.pop 512.0
          %v985 = vmul.f32 512.0, %v984
          %v986 = vsub.f32 1.0, %v985
          %v987 = vmul.f32 %v984, %v986
          %v988 = vadd.f32 %v984, %v987
          %vm989 = vweird.f32 %v984
          %v990 = vsel %vm989, %v984, %v988
          %v991 = vmul.f32 %v983, %v990
          %s992 = scalar_lea.vmem [#allocation3], 8
          %v993 = vld [vmem:[%s992] sm:$0xff]
          %v994 = vmul.f32 %v993, %v990
          %v995 = vmul.f32 %v991, %v991
          %v996 = vsub.f32 %v994, %v995
          %v997 = vmax.f32 %v996, 0.0
          %v998 = vld [vmem:[%s2] sm:$0xff]
          %v999 = vadd.f32 %v997, 1e-05
          %v1000 = vrsqrt.pop %v999
          %v1001 = vmul.f32 %v1000, %v999
          %v1002 = vmul.f32 %v1001, %v1000
          %v1003 = vmul.f32 0.5, %v1002
          %v1004 = vsub.f32 1.5, %v1003
          %v1005 = vmul.f32 %v1000, %v1004
          %vm1006 = vweird.f32 %v999
          %vm1007 = vweird.f32 %v1000
          %vm1008 = vmor %vm1006, %vm1007
          %v1009 = vsel %vm1008, %v1000, %v1005
          %v1010 = vmul.f32 %v998, %v1009
          %vm1011 = vcmask 7168
          %1012 = vst.msk [vmem:[#allocation4] sm:$0xff] %vm1011, %v1010
          %v1013 = vld [vmem:[%s3] sm:$0xff]
          %v1014 = vmul.f32 %v991, %v1010
          %v1015 = vsub.f32 %v1013, %v1014
          %s1016 = scalar_lea.vmem [#allocation4], 8
          %1017 = vst.msk [vmem:[%s1016] sm:$0xff] %vm1011, %v1015
        $region52: #{conv_norm_act_2d.1} parent=47 // pred_fallthru
          _
        %s1018 = smul.u32 %s20, 2
        %s1019 = smul.addr %s1018, 8
        %s1020 = scalar_lea.vmem [#allocation2], %s1019
        %v1021 = vld [vmem:[%s1020] sm:$0xff]
        %v1022 = vld [vmem:[%s1020 + $0x8] sm:$0xff]
        %v1023 = vld [vmem:[#allocation4] sm:$0xff]
        %1025 = vset.pattern.permute.xlu0 0
        %1026 = vperm.xlu0 %1025, %v1023
        %v1027 = vpop.permute.xlu0 %1026
        %v1029 = vmul.f32 %v1021, %v1027
        %v1030 = vmul.f32 %v1022, %v1027
        %s1031 = scalar_lea.vmem [#allocation4], 8
        %v1032 = vld [vmem:[%s1031] sm:$0xff]
        %1034 = vset.pattern.permute.xlu0 0
        %1035 = vperm.xlu0 %1034, %v1032
        %v1036 = vpop.permute.xlu0 %1035
        %v1038 = vadd.f32 %v1029, %v1036
        %v1039 = vadd.f32 %v1030, %v1036
        %v1040 = vmax.f32 %v1038, 0.0
        %v1041 = vmax.f32 %v1039, 0.0
        %1042 = vst [vmem:[%s227] sm:$0xff] %v1040
        %1043 = vst [vmem:[%s227 + $0x8] sm:$0xff] %v1041
      $region48: #{conv_norm_act_2d.1} parent=35 // pred_fallthru
        _
      %s1044 = smul.u32 %s19, %s20
      %p1045 = scmp.lt.s32.totalorder %s1044, 1
      %s1046 = scalar_select %p1045, %s1044, 1
      %s1047 = smul.addr %s1046, 2
      %s1048 = smul.addr %s1047, 8
      %s1049 = scalar_lea.vmem %s4, %s1048
      // Predicated region
      $region53: #{conv_norm_act_2d.1} parent=35 // pred_check
        %p1050 = pneg %p140
      $region54: #{conv_norm_act_2d.1} parent=35 // pred_check_branch
        %1052 = sbr.rel (%p1050) target = $region56
      $region55: #{conv_norm_act_2d.1} parent=35 // pred_region
        %s1053 = smul.u32 %s19, %s20
      $region56: #{conv_norm_act_2d.1} parent=35 // pred_fallthru
        _
    $region36: #{conv_norm_act_2d.1} parent=5 // pred_fallthru
      _
    %p1054 = scmp.le.s32.totalorder 2, %s10
    // Predicated region
    $region57: #{conv_norm_act_2d.1} parent=5 // pred_check
      %p1055 = pneg %p1054
    $region58: #{conv_norm_act_2d.1} parent=5 // pred_check_branch
      %1057 = sbr.rel (%p1055) target = $region60
    $region59: #{conv_norm_act_2d.1} parent=5 // pred_region
      %s1058 = ssub.s32 %s10, 2
      // Predicated region
      $region61: #{conv_norm_act_2d.1} parent=59 // pred_check
        %p1059 = pneg %p146
      $region62: #{conv_norm_act_2d.1} parent=59 // pred_check_branch
        %1061 = sbr.rel (%p1059) target = $region64
      $region63: #{conv_norm_act_2d.1} parent=59 // pred_region
        %s1062 = smul.u32 %s21, %s22
        %p1063 = scmp.lt.s32.totalorder %s1062, 1
        %s1064 = scalar_select %p1063, %s1062, 1
        %s1065 = smul.addr %s1064, 2
        %s1066 = smul.addr %s1065, 8
        %s1067 = scalar_lea.vmem %s4, %s1066
      $region64: #{conv_norm_act_2d.1} parent=59 // pred_fallthru
        _
    $region60: #{conv_norm_act_2d.1} parent=5 // pred_fallthru
      _
  $region6: #{conv_norm_act_2d.1} parent=0 // loop_footer
    %s14 = sadd.s32 1, %s10
  $region7: #{conv_norm_act_2d.1} parent=0 // loop_footer_branch
    %9 = sbr.rel target = $region3
  $region8: #{conv_norm_act_2d.1} parent=0 // loop_exit
    _

</llo_original>
